<compile_context>
chip_gen: v7x
topology: tpu7x:2x2x1
jax: 0.10.0
libtpu: 0.0.40
codegen_flags: <defaults>
</compile_context>

<pallas_src>
import jax
import jax.numpy as jnp
from jax.experimental import pallas as pl
from jax.experimental.pallas import tpu as pltpu


# ----------------------------- config ---------------------------------------
FEAT_DIM = 4            # channels of the `features` tensor passed to forward()
OUT_CHANNELS = 3
PE_VIEW = 2             # module defaults (> 0 assumed, as in the spec)
PE_FEAT = 2
DIM_MLP = 128

RAW_DIM = 3 + FEAT_DIM + 3                      # [xyz | features | viewdirs] = 10
PE_DIM = 3 * PE_FEAT + 3 * PE_VIEW              # 12 phase columns (pre sin/cos)
IN_FEAT = RAW_DIM + 2 * PE_DIM                  # 34 MLP input channels
TILE_N = 2048                                   # points per grid step (sweepable)
MIN_GRID_STEPS = 8                              # keep grid long enough for 2 TCs


def _round_up(x, m):
    return ((x + m - 1) // m) * m


# --------------------------- pallas kernel ----------------------------------
def _mlp_kernel(x_ref, w1t_ref, b1_ref, w2t_ref, b2_ref, w3t_ref, b3_ref, o_ref):
    # x_ref: (IN_FEAT, T) f32.  Rows < RAW_DIM are raw [xyz|feat|view] columns;
    # rows >= RAW_DIM are pre-shifted PE phases -> one dense EUP sin gives the
    # full trig slab in the module's exact channel order.
    xin = x_ref[...]
    row = jax.lax.broadcasted_iota(jnp.int32, xin.shape, 0)
    x = jnp.where(row < RAW_DIM, xin, jnp.sin(xin))          # f32 elementwise

    # Layer 1: single fused K=34 bf16 MXU matmul, f32 accumulation.
    h1 = jnp.dot(w1t_ref[...], x.astype(jnp.bfloat16),
                 preferred_element_type=jnp.float32)
    h1 = jnp.maximum(h1 + b1_ref[...], 0.0)                  # ReLU, (128, T) f32

    # Layer 2.
    h2 = jnp.dot(w2t_ref[...], h1.astype(jnp.bfloat16),
                 preferred_element_type=jnp.float32)
    h2 = jnp.maximum(h2 + b2_ref[...], 0.0)                  # ReLU, (128, T) f32

    # Layer 3 directly in (C, T) orientation -> lane-dense store, no transpose.
    z = jnp.dot(w3t_ref[...], h2.astype(jnp.bfloat16),
                preferred_element_type=jnp.float32) + b3_ref[...]
    o_ref[...] = (1.0 / (1.0 + jnp.exp(-z))).astype(o_ref.dtype)   # sigmoid


def mlp_forward_pallas(x_head, w1t, b1, w2t, b2, w3t, b3, *, tile_n=TILE_N):
    in_feat, n = x_head.shape
    c = w3t.shape[0]

    # Big tiles amortize per-step overhead; cap so the grid keeps >= MIN_GRID_STEPS
    # steps (v7x has 2 TensorCores to balance).  Tile is a multiple of 128 so the
    # output lane dim stays unmasked.
    tile = max(128, min(_round_up(tile_n, 128),
                        _round_up(pl.cdiv(n, MIN_GRID_STEPS), 128)))
    n_pad = _round_up(n, tile)
    if n_pad != n:
        x_head = jnp.pad(x_head, ((0, 0), (0, n_pad - n)))

    grid = (n_pad // tile,)
    out_t = pl.pallas_call(
        _mlp_kernel,
        out_shape=jax.ShapeDtypeStruct((c, n_pad), jnp.float32),
        grid_spec=pltpu.PrefetchScalarGridSpec(
            num_scalar_prefetch=0,
            grid=grid,
            in_specs=[
                pl.BlockSpec((in_feat, tile), lambda i: (0, i)),   # [raw | phases]
                pl.BlockSpec(w1t.shape, lambda i: (0, 0)),         # W1^T (128, 34)
                pl.BlockSpec(b1.shape, lambda i: (0, 0)),          # b1   (128, 1)
                pl.BlockSpec(w2t.shape, lambda i: (0, 0)),         # W2^T (128, 128)
                pl.BlockSpec(b2.shape, lambda i: (0, 0)),          # b2   (128, 1)
                pl.BlockSpec(w3t.shape, lambda i: (0, 0)),         # W3^T (3, 128)
                pl.BlockSpec(b3.shape, lambda i: (0, 0)),          # b3   (3, 1)
            ],
            out_specs=pl.BlockSpec((c, tile), lambda i: (0, i)),   # lane-dense (3, N)
        ),
        compiler_params=pltpu.CompilerParams(
            dimension_semantics=("parallel",),
        ),
    )(x_head, w1t, b1, w2t, b2, w3t, b3)
    return out_t[:, :n]                                            # (C, N)


# ------------------------- forward-pass glue --------------------------------
def positional_encoding(positions, freqs):
    # Matches MLPRenderFeature.positional_encoding exactly (reference only).
    freq_bands = (2.0 ** jnp.arange(freqs)).astype(positions.dtype)
    pts = (positions[..., None] * freq_bands).reshape(
        positions.shape[:-1] + (freqs * positions.shape[-1],))
    return jnp.concatenate([jnp.sin(pts), jnp.cos(pts)], axis=-1)


def build_kernel_inputs(xyz, viewdirs, features):
    """Build the (IN_FEAT, N) kernel input directly in the transposed layout.

    Rows 0..RAW_DIM-1: [xyz | features | viewdirs] (kernel passes them through).
    Rows RAW_DIM..   : pre-scaled PE phases with the cos phases shifted by pi/2,
    ordered so a single in-kernel sin reproduces
    [sin(PE(xyz)), cos(PE(xyz)), sin(PE(view)), cos(PE(view))] — the module's
    exact concat order, so W1 needs only a transpose (no row permutation).
    """
    n = xyz.shape[0]
    xyz_t = xyz.T                    # (3, N)
    view_t = viewdirs.T              # (3, N)
    feat_t = features.T              # (FEAT_DIM, N)

    fb_feat = (2.0 ** jnp.arange(PE_FEAT)).astype(jnp.float32)
    fb_view = (2.0 ** jnp.arange(PE_VIEW)).astype(jnp.float32)
    # Row order [x*f0, x*f1, y*f0, y*f1, z*f0, z*f1] matches the torch reshape.
    ph_xyz = (xyz_t[:, None, :] * fb_feat[None, :, None]).reshape(3 * PE_FEAT, n)
    ph_view = (view_t[:, None, :] * fb_view[None, :, None]).reshape(3 * PE_VIEW, n)

    half_pi = jnp.float32(0.5 * jnp.pi)
    return jnp.concatenate(
        [xyz_t, feat_t, view_t,
         ph_xyz, ph_xyz + half_pi,
         ph_view, ph_view + half_pi], axis=0)                      # (IN_FEAT, N) f32


def init_params(key):
    # torch.nn.Linear default init: U(-1/sqrt(fan_in), 1/sqrt(fan_in)); final bias = 0.
    ks = jax.random.split(key, 3)

    def linear(k, fan_in, fan_out):
        kw, kb = jax.random.split(k)
        bound = 1.0 / jnp.sqrt(float(fan_in))
        w = jax.random.uniform(kw, (fan_in, fan_out), jnp.float32, -bound, bound)
        b = jax.random.uniform(kb, (1, fan_out), jnp.float32, -bound, bound)
        return w, b

    w1, b1 = linear(ks[0], IN_FEAT, DIM_MLP)
    w2, b2 = linear(ks[1], DIM_MLP, DIM_MLP)
    w3, _ = linear(ks[2], DIM_MLP, OUT_CHANNELS)
    b3 = jnp.zeros((1, OUT_CHANNELS), jnp.float32)      # constant_(bias, 0)
    return w1, b1, w2, b2, w3, b3


def prepare_kernel_params(params):
    # Transposed weights for the (channels, T) kernel orientation; matmul operands
    # in bf16, biases in f32 as (C, 1) columns that broadcast over the lane dim.
    w1, b1, w2, b2, w3, b3 = params
    return (w1.T.astype(jnp.bfloat16),            # (DIM_MLP, IN_FEAT)
            b1.reshape(DIM_MLP, 1),
            w2.T.astype(jnp.bfloat16),            # (DIM_MLP, DIM_MLP)
            b2.reshape(DIM_MLP, 1),
            w3.T.astype(jnp.bfloat16),            # (OUT_CHANNELS, DIM_MLP)
            b3.reshape(OUT_CHANNELS, 1))          # (OUT_CHANNELS, 1)


@jax.jit
def mlp_render_feature_forward(xyz, viewdirs, features, kernel_params):
    x_head = build_kernel_inputs(xyz, viewdirs, features)      # (IN_FEAT, N)
    out_t = mlp_forward_pallas(x_head, *kernel_params)         # (3, N) lane-dense
    return out_t.T                                             # (N, 3), module layout


def reference_forward(xyz, viewdirs, features, params):
    # Pure-JAX f32 reference mirroring the PyTorch forward exactly.
    w1, b1, w2, b2, w3, b3 = params
    indata = [xyz, features, viewdirs,
              positional_encoding(xyz, PE_FEAT),
              positional_encoding(viewdirs, PE_VIEW)]
    x = jnp.concatenate(indata, axis=-1)
    assert x.shape[-1] == IN_FEAT
    h1 = jnp.maximum(x @ w1 + b1, 0.0)
    h2 = jnp.maximum(h1 @ w2 + b2, 0.0)
    return jax.nn.sigmoid(h2 @ w3 + b3)


# --------------------------------- main --------------------------------------
if __name__ == "__main__":
    key = jax.random.PRNGKey(0)
    k_param, k_xyz, k_view, k_feat = jax.random.split(key, 4)

    N = 2048  # small demo size; tile logic yields an 8-step grid (balances v7x TCs)
    xyz = jax.random.normal(k_xyz, (N, 3), jnp.float32)
    viewdirs = jax.random.normal(k_view, (N, 3), jnp.float32)
    viewdirs = viewdirs / jnp.linalg.norm(viewdirs, axis=-1, keepdims=True)
    features = jax.random.normal(k_feat, (N, FEAT_DIM), jnp.float32)

    params = init_params(k_param)
    kernel_params = prepare_kernel_params(params)

    out = mlp_render_feature_forward(xyz, viewdirs, features, kernel_params)
    out = jax.block_until_ready(out)

    ref = reference_forward(xyz, viewdirs, features, params)
    assert out.shape == (N, OUT_CHANNELS)
    # bf16 matmuls with f32 accumulation vs f32 reference -> loose tolerance.
    max_err = float(jnp.max(jnp.abs(out - ref)))
    assert max_err < 2e-2, f"mismatch vs reference: {max_err}"

    print("KERNEL_OK")
</pallas_src>

<mosaic_0001>
module attributes {stable_mosaic.version = 11 : i64} {
  func.func @_mlp_kernel(%arg0: i32, %arg1: memref<34x256xf32, #tpu.memory_space<vmem>>, %arg2: memref<128x34xbf16, #tpu.memory_space<vmem>>, %arg3: memref<128x1xf32, #tpu.memory_space<vmem>>, %arg4: memref<128x128xbf16, #tpu.memory_space<vmem>>, %arg5: memref<128x1xf32, #tpu.memory_space<vmem>>, %arg6: memref<3x128xbf16, #tpu.memory_space<vmem>>, %arg7: memref<3x1xf32, #tpu.memory_space<vmem>>, %arg8: memref<3x256xf32, #tpu.memory_space<vmem>>) attributes {dimension_semantics = [#tpu.dimension_semantics<parallel>], iteration_bounds = array<i64: 8>, scalar_prefetch = 0 : i64, scratch_operands = 0 : i64, tpu.core_type = #tpu.core_type<tc>, window_params = [{transform_indices = @transform_0, window_bounds = array<i64: 34, 256>}, {pipeline_mode = #tpu.pipeline_mode<synchronous>, transform_indices = @transform_1, window_bounds = array<i64: 128, 34>}, {pipeline_mode = #tpu.pipeline_mode<synchronous>, transform_indices = @transform_2, window_bounds = array<i64: 128, 1>}, {pipeline_mode = #tpu.pipeline_mode<synchronous>, transform_indices = @transform_3, window_bounds = array<i64: 128, 128>}, {pipeline_mode = #tpu.pipeline_mode<synchronous>, transform_indices = @transform_4, window_bounds = array<i64: 128, 1>}, {pipeline_mode = #tpu.pipeline_mode<synchronous>, transform_indices = @transform_5, window_bounds = array<i64: 3, 128>}, {pipeline_mode = #tpu.pipeline_mode<synchronous>, transform_indices = @transform_6, window_bounds = array<i64: 3, 1>}, {transform_indices = @transform_7, window_bounds = array<i64: 3, 256>}]} {
    %c0 = arith.constant 0 : index
    %c0_0 = arith.constant 0 : index
    %0 = vector.load %arg1[%c0, %c0_0] : memref<34x256xf32, #tpu.memory_space<vmem>>, vector<34x256xf32>
    %1 = tpu.iota {dimensions = array<i32: 0>} : vector<34x256xi32>
    %c10_i32 = arith.constant 10 : i32
    %2 = vector.broadcast %c10_i32 : i32 to vector<34x256xi32>
    %3 = arith.cmpi slt, %1, %2 : vector<34x256xi32>
    %4 = math.sin %0 : vector<34x256xf32>
    %5 = arith.select %3, %0, %4 : vector<34x256xi1>, vector<34x256xf32>
    %c0_1 = arith.constant 0 : index
    %c0_2 = arith.constant 0 : index
    %6 = vector.load %arg2[%c0_1, %c0_2] : memref<128x34xbf16, #tpu.memory_space<vmem>>, vector<128x34xbf16>
    %7 = arith.truncf %5 : vector<34x256xf32> to vector<34x256xbf16>
    %cst = arith.constant dense<0.000000e+00> : vector<128x256xf32>
    %8 = tpu.matmul %6, %7, %cst {dimension_numbers = #tpu.dot_dimension_numbers<[1], [0], [0], [1], [0, 0, 1, 1], [], []>} : vector<128x34xbf16>, vector<34x256xbf16>, vector<128x256xf32> -> vector<128x256xf32>
    %c0_3 = arith.constant 0 : index
    %c0_4 = arith.constant 0 : index
    %9 = vector.load %arg3[%c0_3, %c0_4] : memref<128x1xf32, #tpu.memory_space<vmem>>, vector<128x1xf32>
    %10 = vector.broadcast %9 : vector<128x1xf32> to vector<128x256xf32>
    %11 = arith.addf %8, %10 : vector<128x256xf32>
    %cst_5 = arith.constant 0.000000e+00 : f32
    %12 = vector.broadcast %cst_5 : f32 to vector<128x256xf32>
    %13 = arith.maximumf %11, %12 : vector<128x256xf32>
    %c0_6 = arith.constant 0 : index
    %c0_7 = arith.constant 0 : index
    %14 = vector.load %arg4[%c0_6, %c0_7] : memref<128x128xbf16, #tpu.memory_space<vmem>>, vector<128x128xbf16>
    %15 = arith.truncf %13 : vector<128x256xf32> to vector<128x256xbf16>
    %cst_8 = arith.constant dense<0.000000e+00> : vector<128x256xf32>
    %16 = tpu.matmul %14, %15, %cst_8 {dimension_numbers = #tpu.dot_dimension_numbers<[1], [0], [0], [1], [0, 0, 1, 1], [], []>} : vector<128x128xbf16>, vector<128x256xbf16>, vector<128x256xf32> -> vector<128x256xf32>
    %c0_9 = arith.constant 0 : index
    %c0_10 = arith.constant 0 : index
    %17 = vector.load %arg5[%c0_9, %c0_10] : memref<128x1xf32, #tpu.memory_space<vmem>>, vector<128x1xf32>
    %18 = vector.broadcast %17 : vector<128x1xf32> to vector<128x256xf32>
    %19 = arith.addf %16, %18 : vector<128x256xf32>
    %cst_11 = arith.constant 0.000000e+00 : f32
    %20 = vector.broadcast %cst_11 : f32 to vector<128x256xf32>
    %21 = arith.maximumf %19, %20 : vector<128x256xf32>
    %c0_12 = arith.constant 0 : index
    %c0_13 = arith.constant 0 : index
    %22 = vector.load %arg6[%c0_12, %c0_13] : memref<3x128xbf16, #tpu.memory_space<vmem>>, vector<3x128xbf16>
    %23 = arith.truncf %21 : vector<128x256xf32> to vector<128x256xbf16>
    %cst_14 = arith.constant dense<0.000000e+00> : vector<3x256xf32>
    %24 = tpu.matmul %22, %23, %cst_14 {dimension_numbers = #tpu.dot_dimension_numbers<[1], [0], [0], [1], [0, 0, 1, 1], [], []>} : vector<3x128xbf16>, vector<128x256xbf16>, vector<3x256xf32> -> vector<3x256xf32>
    %c0_15 = arith.constant 0 : index
    %c0_16 = arith.constant 0 : index
    %25 = vector.load %arg7[%c0_15, %c0_16] : memref<3x1xf32, #tpu.memory_space<vmem>>, vector<3x1xf32>
    %26 = vector.broadcast %25 : vector<3x1xf32> to vector<3x256xf32>
    %27 = arith.addf %24, %26 : vector<3x256xf32>
    %cst_17 = arith.constant 0.000000e+00 : f32
    %28 = vector.broadcast %cst_17 : f32 to vector<3x256xf32>
    %29 = arith.subf %28, %27 : vector<3x256xf32>
    %30 = math.exp %29 : vector<3x256xf32>
    %cst_18 = arith.constant 1.000000e+00 : f32
    %31 = vector.broadcast %cst_18 : f32 to vector<3x256xf32>
    %32 = arith.addf %31, %30 : vector<3x256xf32>
    %cst_19 = arith.constant 1.000000e+00 : f32
    %33 = vector.broadcast %cst_19 : f32 to vector<3x256xf32>
    %34 = arith.divf %33, %32 : vector<3x256xf32>
    %c0_20 = arith.constant 0 : index
    %c0_21 = arith.constant 0 : index
    %35 = vector.load %arg8[%c0_20, %c0_21] : memref<3x256xf32, #tpu.memory_space<vmem>>, vector<3x256xf32>
    tpu.vector_store %arg8[%c0_20, %c0_21], %34 {strides = array<i32>} : memref<3x256xf32, #tpu.memory_space<vmem>>, vector<3x256xf32>,
    return
  }
  func.func @transform_0(%arg0: i32) -> (i32, i32) {
    %c0_i32 = arith.constant 0 : i32
    %c0_i32_0 = arith.constant 0 : i32
    return %c0_i32, %arg0 : i32, i32
  }
  func.func @transform_1(%arg0: i32) -> (i32, i32) {
    %c0_i32 = arith.constant 0 : i32
    %c0_i32_0 = arith.constant 0 : i32
    %c0_i32_1 = arith.constant 0 : i32
    return %c0_i32, %c0_i32_0 : i32, i32
  }
  func.func @transform_2(%arg0: i32) -> (i32, i32) {
    %c0_i32 = arith.constant 0 : i32
    %c0_i32_0 = arith.constant 0 : i32
    %c0_i32_1 = arith.constant 0 : i32
    return %c0_i32, %c0_i32_0 : i32, i32
  }
  func.func @transform_3(%arg0: i32) -> (i32, i32) {
    %c0_i32 = arith.constant 0 : i32
    %c0_i32_0 = arith.constant 0 : i32
    %c0_i32_1 = arith.constant 0 : i32
    return %c0_i32, %c0_i32_0 : i32, i32
  }
  func.func @transform_4(%arg0: i32) -> (i32, i32) {
    %c0_i32 = arith.constant 0 : i32
    %c0_i32_0 = arith.constant 0 : i32
    %c0_i32_1 = arith.constant 0 : i32
    return %c0_i32, %c0_i32_0 : i32, i32
  }
  func.func @transform_5(%arg0: i32) -> (i32, i32) {
    %c0_i32 = arith.constant 0 : i32
    %c0_i32_0 = arith.constant 0 : i32
    %c0_i32_1 = arith.constant 0 : i32
    return %c0_i32, %c0_i32_0 : i32, i32
  }
  func.func @transform_6(%arg0: i32) -> (i32, i32) {
    %c0_i32 = arith.constant 0 : i32
    %c0_i32_0 = arith.constant 0 : i32
    %c0_i32_1 = arith.constant 0 : i32
    return %c0_i32, %c0_i32_0 : i32, i32
  }
  func.func @transform_7(%arg0: i32) -> (i32, i32) {
    %c0_i32 = arith.constant 0 : i32
    %c0_i32_0 = arith.constant 0 : i32
    return %c0_i32, %arg0 : i32, i32
  }
}

</mosaic_0001>

<llo_original>
// kernel: mlp_render_feature_forward.1
$region0: #{mlp_render_feature_forward.1}
  #allocation0 [shape = 'u32[]', space=smem, size = 0x4, offset = 0x4, fixed_abs, tag = 'smem constant byte address 0x4 - core index']
  #allocation1 [shape = 'u32[144,128]{1,0:T(1,128)}', space=vmem, size = 0x12000, scoped, tag = 'internal scratch']
  %s0 = inlined_call_operand.vmem [shape: f32[34,2048], index: 0, kind: input, shape index: {}]
  %s1 = inlined_call_operand.vmem [shape: bf16[128,34], index: 1, kind: input, shape index: {}]
  %s2 = inlined_call_operand.vmem [shape: f32[128,1], index: 2, kind: input, shape index: {}]
  %s3 = inlined_call_operand.vmem [shape: bf16[128,128], index: 3, kind: input, shape index: {}]
  %s4 = inlined_call_operand.vmem [shape: f32[128,1], index: 4, kind: input, shape index: {}]
  %s5 = inlined_call_operand.vmem [shape: bf16[3,128], index: 5, kind: input, shape index: {}]
  %s6 = inlined_call_operand.vmem [shape: f32[3,1], index: 6, kind: input, shape index: {}]
  %s7 = inlined_call_operand.hbm [shape: f32[3,2048], index: 7, kind: output, shape index: {}]
  %s8 = sld [smem:[#allocation0]]
  $region84: #{mlp_render_feature_forward.1} parent=0
    _
  %s10 = ssub.s32 1, %s8
  %s11 = scalar_select 0, %s10, %s8
  $region1: #{mlp_render_feature_forward.1} parent=0
    #allocation2 [shape = 'u8[81920]{0}', space=vmem, size = 0x14000, scoped, tag = 'input window, operand 0']
    #allocation3 [shape = 'u8[8192]{0}', space=vmem, size = 0x2000, scoped, tag = 'output window, operand 0']
    #allocation4 [shape = 's32[2]{0}', space=sflag, size = 0x8, scoped, tag = 'scoped memory for mlp_render_feature_forward.1']
    %12 = vsyncpa [#allocation4], 0
    %s13 = scalar_lea.sflag [#allocation4], 1
    %14 = vsyncpa %s13, 0
    loop: start=0, step=1, limit=10
    $region2: #{mlp_render_feature_forward.1} parent=1 // loop_pre_header
      _
    $region3: #{mlp_render_feature_forward.1} parent=1 // loop_header
      %s16 = sphi 0, %s20
      %p17 = scmp.ge.s32.totalorder %s16, 10
      %s26 = sphi 0, %s28
      %s29 = sphi 0, %s26
      %s30 = sphi 0, %s29
      %s46 = sphi 0, %s30
      %s50 = sphi 0, %s50
      %s52 = sphi 0, %s50
      %s53 = sphi 0, %s52
      %s67 = sphi 0, %s53
      %s71 = sphi 0, %s71
      %s73 = sphi 0, %s71
      %s74 = sphi 0, %s73
      %s88 = sphi 0, %s74
      %s92 = sphi 0, %s92
      %s94 = sphi 0, %s92
      %s95 = sphi 0, %s94
      %s109 = sphi 0, %s95
      %s113 = sphi 0, %s113
      %s115 = sphi 0, %s113
      %s116 = sphi 0, %s115
      %s130 = sphi 0, %s116
      %s134 = sphi 0, %s134
      %s136 = sphi 0, %s134
      %s137 = sphi 0, %s136
      %s151 = sphi 0, %s137
      %s155 = sphi 0, %s155
      %s157 = sphi 0, %s155
      %s158 = sphi 0, %s157
      %s172 = sphi 0, %s158
      %s178 = sphi 0, %s180
      %s181 = sphi 0, %s178
      %s182 = sphi 0, %s181
      %s198 = sphi 0, %s182
    $region4: #{mlp_render_feature_forward.1} parent=1 // loop_header_branch
      %19 = sbr.rel (%p17) target = $region8
    $region5: #{mlp_render_feature_forward.1} parent=1 // loop_body
      %s21 = ssub.s32 %s16, 1
      %s22 = ssub.s32 %s16, 2
      %s23 = sadd.s32 %s16, 1
      %s24 = ssub.s32 %s16, %s23
      %p25 = scmp.eq.s32.totalorder %s24, 0
      %s27 = sadd.s32 %s26, 1
      %s28 = scalar_select %p25, %s26, %s27
      %p31 = pneg %p25
      %p32 = scmp.eq.s32.totalorder %s16, 7
      %p33 = por %p31, %p32
      %p34 = scmp.ne.s32.totalorder %s26, %s29
      %p35 = scmp.eq.s32.totalorder %s16, 0
      %p36 = por %p34, %p35
      %p37 = scmp.ne.s32.totalorder %s26, %s29
      %p38 = scmp.eq.s32.totalorder %s21, 7
      %p39 = por %p37, %p38
      %p40 = scmp.ne.s32.totalorder %s29, %s30
      %p41 = scmp.eq.s32.totalorder %s21, 0
      %p42 = por %p40, %p41
      %p43 = scmp.ne.s32.totalorder %s29, %s30
      %p44 = scmp.eq.s32.totalorder %s22, 7
      %p45 = por %p43, %p44
      %p47 = scmp.ne.s32.totalorder %s30, %s46
      %p48 = scmp.eq.s32.totalorder %s22, 0
      %p49 = por %p47, %p48
      %s51 = sadd.s32 %s50, 1
      %p54 = scmp.eq.s32.totalorder %s16, 7
      %p55 = scmp.ne.s32.totalorder %s50, %s52
      %p56 = scmp.eq.s32.totalorder %s16, 0
      %p57 = por %p55, %p56
      %p58 = scmp.ne.s32.totalorder %s50, %s52
      %p59 = scmp.eq.s32.totalorder %s21, 7
      %p60 = por %p58, %p59
      %p61 = scmp.ne.s32.totalorder %s52, %s53
      %p62 = scmp.eq.s32.totalorder %s21, 0
      %p63 = por %p61, %p62
      %p64 = scmp.ne.s32.totalorder %s52, %s53
      %p65 = scmp.eq.s32.totalorder %s22, 7
      %p66 = por %p64, %p65
      %p68 = scmp.ne.s32.totalorder %s53, %s67
      %p69 = scmp.eq.s32.totalorder %s22, 0
      %p70 = por %p68, %p69
      %s72 = sadd.s32 %s71, 1
      %p75 = scmp.eq.s32.totalorder %s16, 7
      %p76 = scmp.ne.s32.totalorder %s71, %s73
      %p77 = scmp.eq.s32.totalorder %s16, 0
      %p78 = por %p76, %p77
      %p79 = scmp.ne.s32.totalorder %s71, %s73
      %p80 = scmp.eq.s32.totalorder %s21, 7
      %p81 = por %p79, %p80
      %p82 = scmp.ne.s32.totalorder %s73, %s74
      %p83 = scmp.eq.s32.totalorder %s21, 0
      %p84 = por %p82, %p83
      %p85 = scmp.ne.s32.totalorder %s73, %s74
      %p86 = scmp.eq.s32.totalorder %s22, 7
      %p87 = por %p85, %p86
      %p89 = scmp.ne.s32.totalorder %s74, %s88
      %p90 = scmp.eq.s32.totalorder %s22, 0
      %p91 = por %p89, %p90
      %s93 = sadd.s32 %s92, 1
      %p96 = scmp.eq.s32.totalorder %s16, 7
      %p97 = scmp.ne.s32.totalorder %s92, %s94
      %p98 = scmp.eq.s32.totalorder %s16, 0
      %p99 = por %p97, %p98
      %p100 = scmp.ne.s32.totalorder %s92, %s94
      %p101 = scmp.eq.s32.totalorder %s21, 7
      %p102 = por %p100, %p101
      %p103 = scmp.ne.s32.totalorder %s94, %s95
      %p104 = scmp.eq.s32.totalorder %s21, 0
      %p105 = por %p103, %p104
      %p106 = scmp.ne.s32.totalorder %s94, %s95
      %p107 = scmp.eq.s32.totalorder %s22, 7
      %p108 = por %p106, %p107
      %p110 = scmp.ne.s32.totalorder %s95, %s109
      %p111 = scmp.eq.s32.totalorder %s22, 0
      %p112 = por %p110, %p111
      %s114 = sadd.s32 %s113, 1
      %p117 = scmp.eq.s32.totalorder %s16, 7
      %p118 = scmp.ne.s32.totalorder %s113, %s115
      %p119 = scmp.eq.s32.totalorder %s16, 0
      %p120 = por %p118, %p119
      %p121 = scmp.ne.s32.totalorder %s113, %s115
      %p122 = scmp.eq.s32.totalorder %s21, 7
      %p123 = por %p121, %p122
      %p124 = scmp.ne.s32.totalorder %s115, %s116
      %p125 = scmp.eq.s32.totalorder %s21, 0
      %p126 = por %p124, %p125
      %p127 = scmp.ne.s32.totalorder %s115, %s116
      %p128 = scmp.eq.s32.totalorder %s22, 7
      %p129 = por %p127, %p128
      %p131 = scmp.ne.s32.totalorder %s116, %s130
      %p132 = scmp.eq.s32.totalorder %s22, 0
      %p133 = por %p131, %p132
      %s135 = sadd.s32 %s134, 1
      %p138 = scmp.eq.s32.totalorder %s16, 7
      %p139 = scmp.ne.s32.totalorder %s134, %s136
      %p140 = scmp.eq.s32.totalorder %s16, 0
      %p141 = por %p139, %p140
      %p142 = scmp.ne.s32.totalorder %s134, %s136
      %p143 = scmp.eq.s32.totalorder %s21, 7
      %p144 = por %p142, %p143
      %p145 = scmp.ne.s32.totalorder %s136, %s137
      %p146 = scmp.eq.s32.totalorder %s21, 0
      %p147 = por %p145, %p146
      %p148 = scmp.ne.s32.totalorder %s136, %s137
      %p149 = scmp.eq.s32.totalorder %s22, 7
      %p150 = por %p148, %p149
      %p152 = scmp.ne.s32.totalorder %s137, %s151
      %p153 = scmp.eq.s32.totalorder %s22, 0
      %p154 = por %p152, %p153
      %s156 = sadd.s32 %s155, 1
      %p159 = scmp.eq.s32.totalorder %s16, 7
      %p160 = scmp.ne.s32.totalorder %s155, %s157
      %p161 = scmp.eq.s32.totalorder %s16, 0
      %p162 = por %p160, %p161
      %p163 = scmp.ne.s32.totalorder %s155, %s157
      %p164 = scmp.eq.s32.totalorder %s21, 7
      %p165 = por %p163, %p164
      %p166 = scmp.ne.s32.totalorder %s157, %s158
      %p167 = scmp.eq.s32.totalorder %s21, 0
      %p168 = por %p166, %p167
      %p169 = scmp.ne.s32.totalorder %s157, %s158
      %p170 = scmp.eq.s32.totalorder %s22, 7
      %p171 = por %p169, %p170
      %p173 = scmp.ne.s32.totalorder %s158, %s172
      %p174 = scmp.eq.s32.totalorder %s22, 0
      %p175 = por %p173, %p174
      %s176 = ssub.s32 %s16, %s23
      %p177 = scmp.eq.s32.totalorder %s176, 0
      %s179 = sadd.s32 %s178, 1
      %s180 = scalar_select %p177, %s178, %s179
      %p183 = pneg %p177
      %p184 = scmp.eq.s32.totalorder %s16, 7
      %p185 = por %p183, %p184
      %p186 = scmp.ne.s32.totalorder %s178, %s181
      %p187 = scmp.eq.s32.totalorder %s16, 0
      %p188 = por %p186, %p187
      %p189 = scmp.ne.s32.totalorder %s178, %s181
      %p190 = scmp.eq.s32.totalorder %s21, 7
      %p191 = por %p189, %p190
      %p192 = scmp.ne.s32.totalorder %s181, %s182
      %p193 = scmp.eq.s32.totalorder %s21, 0
      %p194 = por %p192, %p193
      %p195 = scmp.ne.s32.totalorder %s181, %s182
      %p196 = scmp.eq.s32.totalorder %s22, 7
      %p197 = por %p195, %p196
      %p199 = scmp.ne.s32.totalorder %s182, %s198
      %p200 = scmp.eq.s32.totalorder %s22, 0
      %p201 = por %p199, %p200
      %p202 = scmp.le.s32.totalorder 1, %s16
      %p203 = scmp.lt.s32.totalorder %s16, 9
      %p204 = pnand %p202, %p203
      %p205 = pneg %p204
      // Predicated region
      $region9: #{mlp_render_feature_forward.1} parent=5 // pred_check
        _
      $region10: #{mlp_render_feature_forward.1} parent=5 // pred_check_branch
        %207 = sbr.rel (%p204) target = $region12
      $region11: #{mlp_render_feature_forward.1} parent=5 // pred_region
        %s208 = ssub.s32 %s16, 1
        // Predicated region
        $region13: #{mlp_render_feature_forward.1} parent=11 // pred_check
          %p209 = pneg %p63
        $region14: #{mlp_render_feature_forward.1} parent=11 // pred_check_branch
          %211 = sbr.rel (%p209) target = $region16
        $region15: #{mlp_render_feature_forward.1} parent=11 // pred_region
          _
        $region16: #{mlp_render_feature_forward.1} parent=11 // pred_fallthru
          _
        // Predicated region
        $region17: #{mlp_render_feature_forward.1} parent=11 // pred_check
          %p212 = pneg %p84
        $region18: #{mlp_render_feature_forward.1} parent=11 // pred_check_branch
          %214 = sbr.rel (%p212) target = $region20
        $region19: #{mlp_render_feature_forward.1} parent=11 // pred_region
          _
        $region20: #{mlp_render_feature_forward.1} parent=11 // pred_fallthru
          _
        // Predicated region
        $region21: #{mlp_render_feature_forward.1} parent=11 // pred_check
          %p215 = pneg %p105
        $region22: #{mlp_render_feature_forward.1} parent=11 // pred_check_branch
          %217 = sbr.rel (%p215) target = $region24
        $region23: #{mlp_render_feature_forward.1} parent=11 // pred_region
          _
        $region24: #{mlp_render_feature_forward.1} parent=11 // pred_fallthru
          _
        // Predicated region
        $region25: #{mlp_render_feature_forward.1} parent=11 // pred_check
          %p218 = pneg %p126
        $region26: #{mlp_render_feature_forward.1} parent=11 // pred_check_branch
          %220 = sbr.rel (%p218) target = $region28
        $region27: #{mlp_render_feature_forward.1} parent=11 // pred_region
          _
        $region28: #{mlp_render_feature_forward.1} parent=11 // pred_fallthru
          _
        // Predicated region
        $region29: #{mlp_render_feature_forward.1} parent=11 // pred_check
          %p221 = pneg %p147
        $region30: #{mlp_render_feature_forward.1} parent=11 // pred_check_branch
          %223 = sbr.rel (%p221) target = $region32
        $region31: #{mlp_render_feature_forward.1} parent=11 // pred_region
          _
        $region32: #{mlp_render_feature_forward.1} parent=11 // pred_fallthru
          _
        // Predicated region
        $region33: #{mlp_render_feature_forward.1} parent=11 // pred_check
          %p224 = pneg %p168
        $region34: #{mlp_render_feature_forward.1} parent=11 // pred_check_branch
          %226 = sbr.rel (%p224) target = $region36
        $region35: #{mlp_render_feature_forward.1} parent=11 // pred_region
          _
        $region36: #{mlp_render_feature_forward.1} parent=11 // pred_fallthru
          _
      $region12: #{mlp_render_feature_forward.1} parent=5 // pred_fallthru
        _
      %p227 = scmp.lt.s32.totalorder %s16, 8
      // Predicated region
      $region37: #{mlp_render_feature_forward.1} parent=5 // pred_check
        %p228 = pneg %p227
      $region38: #{mlp_render_feature_forward.1} parent=5 // pred_check_branch
        %230 = sbr.rel (%p228) target = $region40
      $region39: #{mlp_render_feature_forward.1} parent=5 // pred_region
        // Predicated region
        $region41: #{mlp_render_feature_forward.1} parent=39 // pred_check
          %p231 = pneg %p36
        $region42: #{mlp_render_feature_forward.1} parent=39 // pred_check_branch
          %233 = sbr.rel (%p231) target = $region44
        $region43: #{mlp_render_feature_forward.1} parent=39 // pred_region
          %s234 = sand.u32 %s26, 1
          %s235 = sand.u32 %s26, 1
          %s236 = smul.addr %s235, 80
          %s237 = scalar_lea.vmem [#allocation2], %s236
          %s238 = smul.u32 2, %s16
          %s239 = smul.addr %s238, 8
          %s240 = scalar_lea.vmem %s0, %s239
          // Predicated region
          $region45: #{mlp_render_feature_forward.1} parent=43 // pred_check
            _
          $region46: #{mlp_render_feature_forward.1} parent=43 // pred_check_branch
            %242 = sbr.rel (0) target = $region48
          $region47: #{mlp_render_feature_forward.1} parent=43 // pred_region
            // Predicated region
            $region49: #{mlp_render_feature_forward.1} parent=47 // pred_check
              _
            $region50: #{mlp_render_feature_forward.1} parent=47 // pred_check_branch
              %244 = sbr.rel (0) target = $region52
            $region51: #{mlp_render_feature_forward.1} parent=47 // pred_region
              loop: start=0, step=1, limit=1
              $region53: #{mlp_render_feature_forward.1} parent=51 // loop_pre_header
                _
              $region54: #{mlp_render_feature_forward.1} parent=51 // loop_header
                %s246 = sphi 0, %s250
                %p247 = scmp.ge.s32.totalorder %s246, 1
                %s251 = sphi %s240, %s240
                %s252 = sphi %s237, %s237
              $region55: #{mlp_render_feature_forward.1} parent=51 // loop_header_branch
                %249 = sbr.rel (%p247) target = $region59
              $region56: #{mlp_render_feature_forward.1} parent=51 // loop_body
                %v253 = vld [vmem:[%s251] sm:$0xff]
                %254 = vst [vmem:[%s252] sm:$0xff] %v253
                %v255 = vld [vmem:[%s251 + $0x8] sm:$0xff]
                %256 = vst [vmem:[%s252 + $0x8] sm:$0xff] %v255
                %v257 = vld [vmem:[%s251 + $0x80] sm:$0xff]
                %258 = vst [vmem:[%s252 + $0x10] sm:$0xff] %v257
                %v259 = vld [vmem:[%s251 + $0x88] sm:$0xff]
                %260 = vst [vmem:[%s252 + $0x18] sm:$0xff] %v259
                %v261 = vld [vmem:[%s251 + $0x100] sm:$0xff]
                %262 = vst [vmem:[%s252 + $0x20] sm:$0xff] %v261
                %v263 = vld [vmem:[%s251 + $0x108] sm:$0xff]
                %264 = vst [vmem:[%s252 + $0x28] sm:$0xff] %v263
                %v265 = vld [vmem:[%s251 + $0x180] sm:$0xff]
                %266 = vst [vmem:[%s252 + $0x30] sm:$0xff] %v265
                %v267 = vld [vmem:[%s251 + $0x188] sm:$0xff]
                %268 = vst [vmem:[%s252 + $0x38] sm:$0xff] %v267
                %v269 = vld [vmem:[%s251 + $0x200] sm:$0xff]
                %270 = vst [vmem:[%s252 + $0x40] sm:$0xff] %v269
                %v271 = vld [vmem:[%s251 + $0x208] sm:$0xff]
                %272 = vst [vmem:[%s252 + $0x48] sm:$0xff] %v271
              $region57: #{mlp_render_feature_forward.1} parent=51 // loop_footer
                %s250 = sadd.s32 1, %s246
              $region58: #{mlp_render_feature_forward.1} parent=51 // loop_footer_branch
                %245 = sbr.rel target = $region54
              $region59: #{mlp_render_feature_forward.1} parent=51 // loop_exit
                _
            $region52: #{mlp_render_feature_forward.1} parent=47 // pred_fallthru
              _
            // Predicated region
            $region60: #{mlp_render_feature_forward.1} parent=47 // pred_check
              _
            $region61: #{mlp_render_feature_forward.1} parent=47 // pred_check_branch
              %274 = sbr.rel target = $region63
            $region62: #{mlp_render_feature_forward.1} parent=47 // pred_region
              _
            $region63: #{mlp_render_feature_forward.1} parent=47 // pred_fallthru
              _
          $region48: #{mlp_render_feature_forward.1} parent=43 // pred_fallthru
            _
          %275 = vnop
        $region44: #{mlp_render_feature_forward.1} parent=39 // pred_fallthru
          _
      $region40: #{mlp_render_feature_forward.1} parent=5 // pred_fallthru
        _
      %p276 = scmp.le.s32.totalorder 1, %s16
      %p277 = scmp.lt.s32.totalorder %s16, 9
      %p278 = pnand %p276, %p277
      %p279 = pneg %p278
      // Predicated region
      $region64: #{mlp_render_feature_forward.1} parent=5 // pred_check
        _
      $region65: #{mlp_render_feature_forward.1} parent=5 // pred_check_branch
        %281 = sbr.rel (%p278) target = $region67
      $region66: #{mlp_render_feature_forward.1} parent=5 // pred_region
        %s282 = ssub.s32 %s16, 1
        %s283 = sand.u32 %s29, 1
        %s284 = sand.u32 %s29, 1
        %s285 = smul.addr %s284, 80
        %s286 = scalar_lea.vmem [#allocation2], %s285
        // Predicated region
        $region68: #{mlp_render_feature_forward.1} parent=66 // pred_check
          %p287 = pneg %p42
        $region69: #{mlp_render_feature_forward.1} parent=66 // pred_check_branch
          %289 = sbr.rel (%p287) target = $region71
        $region70: #{mlp_render_feature_forward.1} parent=66 // pred_region
          _
        $region71: #{mlp_render_feature_forward.1} parent=66 // pred_fallthru
          _
        %s290 = sand.u32 %s29, 1
        %s291 = sand.u32 %s29, 1
        %s292 = smul.addr %s291, 80
        %s293 = scalar_lea.vmem [#allocation2], %s292
        %p294 = pneg %p42
        %p295 = pneg %p39
        %p296 = pneg %p63
        %p297 = pneg %p60
        %p298 = pneg %p84
        %p299 = pneg %p81
        %p300 = pneg %p105
        %p301 = pneg %p102
        %p302 = pneg %p126
        %p303 = pneg %p123
        %p304 = pneg %p147
        %p305 = pneg %p144
        %p306 = pneg %p168
        %p307 = pneg %p165
        %p308 = pneg %p194
        %p309 = pneg %p191
        %s310 = sand.u32 %s181, 1
        %s311 = scalar_lea.sflag [#allocation4], %s310
        %s312 = sand.u32 %s181, 1
        %s313 = smul.addr %s312, 8
        %s314 = scalar_lea.vmem [#allocation3], %s313
        %s315 = smul.u32 2, %s21
        %s316 = smul.u32 2, %s21
        %v318 = vld [vmem:[%s286] sm:$0xff]
        %v319 = vld [vmem:[%s286 + $0x8] sm:$0xff]
        %v320 = vld [vmem:[%s286 + $0x10] sm:$0xff]
        %v321 = vld [vmem:[%s286 + $0x18] sm:$0xff]
        %v322 = vld [vmem:[%s286 + $0x20] sm:$0xff]
        %v323 = vld [vmem:[%s286 + $0x28] sm:$0xff]
        %v324 = vld [vmem:[%s286 + $0x30] sm:$0xff]
        %v325 = vld [vmem:[%s286 + $0x38] sm:$0xff]
        %v326 = vld [vmem:[%s286 + $0x40] sm:$0x3]
        %v327 = vld [vmem:[%s286 + $0x48] sm:$0x3]
        %v328 = vlaneseq
        %v329 = vshrl.u32 %v328, 7
        %v330 = vadd.s32 %v329, 8
        %v331 = vadd.s32 %v329, 16
        %v332 = vadd.s32 %v329, 24
        %v333 = vadd.s32 %v329, 32
        %vm334 = vcmp.lt.s32.totalorder %v329, 10
        %vm335 = vcmp.lt.s32.totalorder %v330, 10
        %vm336 = vcmp.lt.s32.totalorder %v331, 10
        %vm337 = vcmp.lt.s32.totalorder %v332, 10
        %vm338 = vcmp.lt.s32.totalorder %v333, 10
        %v339 = vand.u32 2147483647, %v318
        %vm340 = vcmp.le.f32.partialorder %v339, 0.7853982
        %vm341 = vcmp.lt.s32.totalorder %v318, 0
        %v342 = vand.u32 %v318, 2139095040
        %v343 = vshrl.u32 %v342, 23
        %v344 = vsub.s32 %v343, 127
        %v345 = vand.u32 2147483647, %v318
        %v346 = vand.u32 %v345, 8388607
        %v347 = vor.u32 %v346, 8388608
        %v348 = vsub.s32 0, %v347
        %v349 = vadd.s32 %v344, 1
        %vm350 = vcmp.gt.s32.totalorder %v349, 0
        %v351 = vsel %vm350, %v349, 0
        %v352 = vshrl.u32 %v351, 5
        %v353 = vand.u32 %v351, 31
        %v354 = vsub.s32 32, %v353
        %v355 = vshrl.u32 683565275, %v354
        %v356 = vshll.u32 683565275, %v353
        %v357 = vshrl.u32 2475754826, %v354
        %v358 = vor.u32 %v356, %v357
        %v359 = vshll.u32 2475754826, %v353
        %v360 = vshrl.u32 2131351028, %v354
        %v361 = vor.u32 %v359, %v360
        %v362 = vshll.u32 2131351028, %v353
        %v363 = vshrl.u32 2102212464, %v354
        %v364 = vor.u32 %v362, %v363
        %v365 = vshll.u32 2102212464, %v353
        %v366 = vshrl.u32 920167782, %v354
        %v367 = vor.u32 %v365, %v366
        %v368 = vshll.u32 920167782, %v353
        %v369 = vshrl.u32 1326507024, %v354
        %v370 = vor.u32 %v368, %v369
        %vm371 = vcmp.lt.s32.totalorder %v352, 1
        %vm372 = vcmp.lt.s32.totalorder %v352, 2
        %vm373 = vcmp.lt.s32.totalorder %v352, 3
        %vm374 = vcmp.lt.s32.totalorder %v352, 4
        %v375 = vsel %vm371, %v355, %v358
        %v376 = vsel %vm374, %v364, 2102212464
        %v377 = vsel %vm373, %v361, %v376
        %v378 = vsel %vm372, %v375, %v377
        %v379 = vsel %vm371, %v358, %v361
        %v380 = vsel %vm374, %v367, 920167782
        %v381 = vsel %vm373, %v364, %v380
        %v382 = vsel %vm372, %v379, %v381
        %v383 = vsel %vm371, %v361, %v364
        %v384 = vsel %vm374, %v370, 1326507024
        %v385 = vsel %vm373, %v367, %v384
        %v386 = vsel %vm372, %v383, %v385
        %v387 = vshll.u32 %v347, 8
        %v388 = vmul.u32.u64.compose %v387, %v386
        %v389 = vextract.low.u32 %v388
        %v390 = vextract.high.u32 %v388
        %v391 = vmul.u32.u64.compose %v387, %v382
        %v392 = vextract.low.u32 %v391
        %v393 = vextract.high.u32 %v391
        %v394 = vmul.u32 %v387, %v378
        %v395 = vadd.s32 %v390, %v392
        %vm396 = vc.u32 %v390, %v392
        %v397 = vadd.s32 %v393, 1
        %v398 = vsel %vm396, %v397, %v393
        %v399 = vadd.s32 %v394, %v398
        %v400 = vadd.s32 %v399, 536870912
        %v401 = vshrl.u32 %v400, 30
        %v402 = vshll.u32 %v401, 30
        %v403 = vsub.s32 %v399, %v402
        %vm404 = vcmp.lt.s32.totalorder %v403, 0
        %v405 = vsub.s32 0, %v403
        %v406 = vsel %vm404, %v405, %v403
        %v407 = vclz %v406
        %v408 = vsub.s32 %v407, 2
        %vm409 = vcmp.gt.s32.totalorder 0, %v408
        %v410 = vsel %vm409, 0, %v408
        %v411 = vsub.s32 32, %v410
        %v412 = vshll.u32 %v403, %v410
        %v413 = vshrl.u32 %v395, %v411
        %v414 = vor.u32 %v412, %v413
        %v415 = vsub.s32 4294967266, %v410
        %v416 = vadd.s32 %v415, 127
        %v417 = vshll.u32 %v416, 23
        %v418 = vor.u32 4788187, %v417
        %v419 = vand.u32 2147483647, %v418
        %v421 = vcvt.s32.f32 %v414
        %v422 = vmul.f32 %v421, %v419
        %v423 = vxor.u32 %v422, 2147483648
        %v424 = vsel %vm341, %v423, %v422
        %v425 = vsub.s32 4, %v401
        %v426 = vsel %vm341, %v425, %v401
        %v427 = vsel %vm340, %v318, %v424
        %v428 = vsel %vm340, 0, %v426
        %v429 = vcosq.f32.pop %v427
        %v430 = vsinq.f32.pop %v427
        %vm431 = vweird.f32 %v318
        %v432 = vadd.s32 %v428, 3
        %v433 = vand.u32 %v432, 3
        %vm434 = vcmp.lt.s32.totalorder %v433, 2
        %vm435 = vcmp.eq.s32.totalorder %v433, 0
        %v436 = vxor.u32 %v430, 2147483648
        %v437 = vsel %vm435, %v429, %v436
        %vm438 = vcmp.eq.s32.totalorder %v433, 2
        %v439 = vxor.u32 %v429, 2147483648
        %v440 = vsel %vm438, %v439, %v430
        %v441 = vsel %vm434, %v437, %v440
        %v442 = vsel %vm431, nan, %v441
        %v443 = vand.u32 2147483647, %v319
        %vm444 = vcmp.le.f32.partialorder %v443, 0.7853982
        %vm445 = vcmp.lt.s32.totalorder %v319, 0
        %v446 = vand.u32 %v319, 2139095040
        %v447 = vshrl.u32 %v446, 23
        %v448 = vsub.s32 %v447, 127
        %v449 = vand.u32 2147483647, %v319
        %v450 = vand.u32 %v449, 8388607
        %v451 = vor.u32 %v450, 8388608
        %v452 = vsub.s32 0, %v451
        %v453 = vadd.s32 %v448, 1
        %vm454 = vcmp.gt.s32.totalorder %v453, 0
        %v455 = vsel %vm454, %v453, 0
        %v456 = vshrl.u32 %v455, 5
        %v457 = vand.u32 %v455, 31
        %v458 = vsub.s32 32, %v457
        %v459 = vshrl.u32 683565275, %v458
        %v460 = vshll.u32 683565275, %v457
        %v461 = vshrl.u32 2475754826, %v458
        %v462 = vor.u32 %v460, %v461
        %v463 = vshll.u32 2475754826, %v457
        %v464 = vshrl.u32 2131351028, %v458
        %v465 = vor.u32 %v463, %v464
        %v466 = vshll.u32 2131351028, %v457
        %v467 = vshrl.u32 2102212464, %v458
        %v468 = vor.u32 %v466, %v467
        %v469 = vshll.u32 2102212464, %v457
        %v470 = vshrl.u32 920167782, %v458
        %v471 = vor.u32 %v469, %v470
        %v472 = vshll.u32 920167782, %v457
        %v473 = vshrl.u32 1326507024, %v458
        %v474 = vor.u32 %v472, %v473
        %vm475 = vcmp.lt.s32.totalorder %v456, 1
        %vm476 = vcmp.lt.s32.totalorder %v456, 2
        %vm477 = vcmp.lt.s32.totalorder %v456, 3
        %vm478 = vcmp.lt.s32.totalorder %v456, 4
        %v479 = vsel %vm475, %v459, %v462
        %v480 = vsel %vm478, %v468, 2102212464
        %v481 = vsel %vm477, %v465, %v480
        %v482 = vsel %vm476, %v479, %v481
        %v483 = vsel %vm475, %v462, %v465
        %v484 = vsel %vm478, %v471, 920167782
        %v485 = vsel %vm477, %v468, %v484
        %v486 = vsel %vm476, %v483, %v485
        %v487 = vsel %vm475, %v465, %v468
        %v488 = vsel %vm478, %v474, 1326507024
        %v489 = vsel %vm477, %v471, %v488
        %v490 = vsel %vm476, %v487, %v489
        %v491 = vshll.u32 %v451, 8
        %v492 = vmul.u32.u64.compose %v491, %v490
        %v493 = vextract.low.u32 %v492
        %v494 = vextract.high.u32 %v492
        %v495 = vmul.u32.u64.compose %v491, %v486
        %v496 = vextract.low.u32 %v495
        %v497 = vextract.high.u32 %v495
        %v498 = vmul.u32 %v491, %v482
        %v499 = vadd.s32 %v494, %v496
        %vm500 = vc.u32 %v494, %v496
        %v501 = vadd.s32 %v497, 1
        %v502 = vsel %vm500, %v501, %v497
        %v503 = vadd.s32 %v498, %v502
        %v504 = vadd.s32 %v503, 536870912
        %v505 = vshrl.u32 %v504, 30
        %v506 = vshll.u32 %v505, 30
        %v507 = vsub.s32 %v503, %v506
        %vm508 = vcmp.lt.s32.totalorder %v507, 0
        %v509 = vsub.s32 0, %v507
        %v510 = vsel %vm508, %v509, %v507
        %v511 = vclz %v510
        %v512 = vsub.s32 %v511, 2
        %vm513 = vcmp.gt.s32.totalorder 0, %v512
        %v514 = vsel %vm513, 0, %v512
        %v515 = vsub.s32 32, %v514
        %v516 = vshll.u32 %v507, %v514
        %v517 = vshrl.u32 %v499, %v515
        %v518 = vor.u32 %v516, %v517
        %v519 = vsub.s32 4294967266, %v514
        %v520 = vadd.s32 %v519, 127
        %v521 = vshll.u32 %v520, 23
        %v522 = vor.u32 4788187, %v521
        %v523 = vand.u32 2147483647, %v522
        %v525 = vcvt.s32.f32 %v518
        %v526 = vmul.f32 %v525, %v523
        %v527 = vxor.u32 %v526, 2147483648
        %v528 = vsel %vm445, %v527, %v526
        %v529 = vsub.s32 4, %v505
        %v530 = vsel %vm445, %v529, %v505
        %v531 = vsel %vm444, %v319, %v528
        %v532 = vsel %vm444, 0, %v530
        %v533 = vcosq.f32.pop %v531
        %v534 = vsinq.f32.pop %v531
        %vm535 = vweird.f32 %v319
        %v536 = vadd.s32 %v532, 3
        %v537 = vand.u32 %v536, 3
        %vm538 = vcmp.lt.s32.totalorder %v537, 2
        %vm539 = vcmp.eq.s32.totalorder %v537, 0
        %v540 = vxor.u32 %v534, 2147483648
        %v541 = vsel %vm539, %v533, %v540
        %vm542 = vcmp.eq.s32.totalorder %v537, 2
        %v543 = vxor.u32 %v533, 2147483648
        %v544 = vsel %vm542, %v543, %v534
        %v545 = vsel %vm538, %v541, %v544
        %v546 = vsel %vm535, nan, %v545
        %v547 = vand.u32 2147483647, %v320
        %vm548 = vcmp.le.f32.partialorder %v547, 0.7853982
        %vm549 = vcmp.lt.s32.totalorder %v320, 0
        %v550 = vand.u32 %v320, 2139095040
        %v551 = vshrl.u32 %v550, 23
        %v552 = vsub.s32 %v551, 127
        %v553 = vand.u32 2147483647, %v320
        %v554 = vand.u32 %v553, 8388607
        %v555 = vor.u32 %v554, 8388608
        %v556 = vsub.s32 0, %v555
        %v557 = vadd.s32 %v552, 1
        %vm558 = vcmp.gt.s32.totalorder %v557, 0
        %v559 = vsel %vm558, %v557, 0
        %v560 = vshrl.u32 %v559, 5
        %v561 = vand.u32 %v559, 31
        %v562 = vsub.s32 32, %v561
        %v563 = vshrl.u32 683565275, %v562
        %v564 = vshll.u32 683565275, %v561
        %v565 = vshrl.u32 2475754826, %v562
        %v566 = vor.u32 %v564, %v565
        %v567 = vshll.u32 2475754826, %v561
        %v568 = vshrl.u32 2131351028, %v562
        %v569 = vor.u32 %v567, %v568
        %v570 = vshll.u32 2131351028, %v561
        %v571 = vshrl.u32 2102212464, %v562
        %v572 = vor.u32 %v570, %v571
        %v573 = vshll.u32 2102212464, %v561
        %v574 = vshrl.u32 920167782, %v562
        %v575 = vor.u32 %v573, %v574
        %v576 = vshll.u32 920167782, %v561
        %v577 = vshrl.u32 1326507024, %v562
        %v578 = vor.u32 %v576, %v577
        %vm579 = vcmp.lt.s32.totalorder %v560, 1
        %vm580 = vcmp.lt.s32.totalorder %v560, 2
        %vm581 = vcmp.lt.s32.totalorder %v560, 3
        %vm582 = vcmp.lt.s32.totalorder %v560, 4
        %v583 = vsel %vm579, %v563, %v566
        %v584 = vsel %vm582, %v572, 2102212464
        %v585 = vsel %vm581, %v569, %v584
        %v586 = vsel %vm580, %v583, %v585
        %v587 = vsel %vm579, %v566, %v569
        %v588 = vsel %vm582, %v575, 920167782
        %v589 = vsel %vm581, %v572, %v588
        %v590 = vsel %vm580, %v587, %v589
        %v591 = vsel %vm579, %v569, %v572
        %v592 = vsel %vm582, %v578, 1326507024
        %v593 = vsel %vm581, %v575, %v592
        %v594 = vsel %vm580, %v591, %v593
        %v595 = vshll.u32 %v555, 8
        %v596 = vmul.u32.u64.compose %v595, %v594
        %v597 = vextract.low.u32 %v596
        %v598 = vextract.high.u32 %v596
        %v599 = vmul.u32.u64.compose %v595, %v590
        %v600 = vextract.low.u32 %v599
        %v601 = vextract.high.u32 %v599
        %v602 = vmul.u32 %v595, %v586
        %v603 = vadd.s32 %v598, %v600
        %vm604 = vc.u32 %v598, %v600
        %v605 = vadd.s32 %v601, 1
        %v606 = vsel %vm604, %v605, %v601
        %v607 = vadd.s32 %v602, %v606
        %v608 = vadd.s32 %v607, 536870912
        %v609 = vshrl.u32 %v608, 30
        %v610 = vshll.u32 %v609, 30
        %v611 = vsub.s32 %v607, %v610
        %vm612 = vcmp.lt.s32.totalorder %v611, 0
        %v613 = vsub.s32 0, %v611
        %v614 = vsel %vm612, %v613, %v611
        %v615 = vclz %v614
        %v616 = vsub.s32 %v615, 2
        %vm617 = vcmp.gt.s32.totalorder 0, %v616
        %v618 = vsel %vm617, 0, %v616
        %v619 = vsub.s32 32, %v618
        %v620 = vshll.u32 %v611, %v618
        %v621 = vshrl.u32 %v603, %v619
        %v622 = vor.u32 %v620, %v621
        %v623 = vsub.s32 4294967266, %v618
        %v624 = vadd.s32 %v623, 127
        %v625 = vshll.u32 %v624, 23
        %v626 = vor.u32 4788187, %v625
        %v627 = vand.u32 2147483647, %v626
        %v629 = vcvt.s32.f32 %v622
        %v630 = vmul.f32 %v629, %v627
        %v631 = vxor.u32 %v630, 2147483648
        %v632 = vsel %vm549, %v631, %v630
        %v633 = vsub.s32 4, %v609
        %v634 = vsel %vm549, %v633, %v609
        %v635 = vsel %vm548, %v320, %v632
        %v636 = vsel %vm548, 0, %v634
        %v637 = vcosq.f32.pop %v635
        %v638 = vsinq.f32.pop %v635
        %vm639 = vweird.f32 %v320
        %v640 = vadd.s32 %v636, 3
        %v641 = vand.u32 %v640, 3
        %vm642 = vcmp.lt.s32.totalorder %v641, 2
        %vm643 = vcmp.eq.s32.totalorder %v641, 0
        %v644 = vxor.u32 %v638, 2147483648
        %v645 = vsel %vm643, %v637, %v644
        %vm646 = vcmp.eq.s32.totalorder %v641, 2
        %v647 = vxor.u32 %v637, 2147483648
        %v648 = vsel %vm646, %v647, %v638
        %v649 = vsel %vm642, %v645, %v648
        %v650 = vsel %vm639, nan, %v649
        %v651 = vand.u32 2147483647, %v321
        %vm652 = vcmp.le.f32.partialorder %v651, 0.7853982
        %vm653 = vcmp.lt.s32.totalorder %v321, 0
        %v654 = vand.u32 %v321, 2139095040
        %v655 = vshrl.u32 %v654, 23
        %v656 = vsub.s32 %v655, 127
        %v657 = vand.u32 2147483647, %v321
        %v658 = vand.u32 %v657, 8388607
        %v659 = vor.u32 %v658, 8388608
        %v660 = vsub.s32 0, %v659
        %v661 = vadd.s32 %v656, 1
        %vm662 = vcmp.gt.s32.totalorder %v661, 0
        %v663 = vsel %vm662, %v661, 0
        %v664 = vshrl.u32 %v663, 5
        %v665 = vand.u32 %v663, 31
        %v666 = vsub.s32 32, %v665
        %v667 = vshrl.u32 683565275, %v666
        %v668 = vshll.u32 683565275, %v665
        %v669 = vshrl.u32 2475754826, %v666
        %v670 = vor.u32 %v668, %v669
        %v671 = vshll.u32 2475754826, %v665
        %v672 = vshrl.u32 2131351028, %v666
        %v673 = vor.u32 %v671, %v672
        %v674 = vshll.u32 2131351028, %v665
        %v675 = vshrl.u32 2102212464, %v666
        %v676 = vor.u32 %v674, %v675
        %v677 = vshll.u32 2102212464, %v665
        %v678 = vshrl.u32 920167782, %v666
        %v679 = vor.u32 %v677, %v678
        %v680 = vshll.u32 920167782, %v665
        %v681 = vshrl.u32 1326507024, %v666
        %v682 = vor.u32 %v680, %v681
        %vm683 = vcmp.lt.s32.totalorder %v664, 1
        %vm684 = vcmp.lt.s32.totalorder %v664, 2
        %vm685 = vcmp.lt.s32.totalorder %v664, 3
        %vm686 = vcmp.lt.s32.totalorder %v664, 4
        %v687 = vsel %vm683, %v667, %v670
        %v688 = vsel %vm686, %v676, 2102212464
        %v689 = vsel %vm685, %v673, %v688
        %v690 = vsel %vm684, %v687, %v689
        %v691 = vsel %vm683, %v670, %v673
        %v692 = vsel %vm686, %v679, 920167782
        %v693 = vsel %vm685, %v676, %v692
        %v694 = vsel %vm684, %v691, %v693
        %v695 = vsel %vm683, %v673, %v676
        %v696 = vsel %vm686, %v682, 1326507024
        %v697 = vsel %vm685, %v679, %v696
        %v698 = vsel %vm684, %v695, %v697
        %v699 = vshll.u32 %v659, 8
        %v700 = vmul.u32.u64.compose %v699, %v698
        %v701 = vextract.low.u32 %v700
        %v702 = vextract.high.u32 %v700
        %v703 = vmul.u32.u64.compose %v699, %v694
        %v704 = vextract.low.u32 %v703
        %v705 = vextract.high.u32 %v703
        %v706 = vmul.u32 %v699, %v690
        %v707 = vadd.s32 %v702, %v704
        %vm708 = vc.u32 %v702, %v704
        %v709 = vadd.s32 %v705, 1
        %v710 = vsel %vm708, %v709, %v705
        %v711 = vadd.s32 %v706, %v710
        %v712 = vadd.s32 %v711, 536870912
        %v713 = vshrl.u32 %v712, 30
        %v714 = vshll.u32 %v713, 30
        %v715 = vsub.s32 %v711, %v714
        %vm716 = vcmp.lt.s32.totalorder %v715, 0
        %v717 = vsub.s32 0, %v715
        %v718 = vsel %vm716, %v717, %v715
        %v719 = vclz %v718
        %v720 = vsub.s32 %v719, 2
        %vm721 = vcmp.gt.s32.totalorder 0, %v720
        %v722 = vsel %vm721, 0, %v720
        %v723 = vsub.s32 32, %v722
        %v724 = vshll.u32 %v715, %v722
        %v725 = vshrl.u32 %v707, %v723
        %v726 = vor.u32 %v724, %v725
        %v727 = vsub.s32 4294967266, %v722
        %v728 = vadd.s32 %v727, 127
        %v729 = vshll.u32 %v728, 23
        %v730 = vor.u32 4788187, %v729
        %v731 = vand.u32 2147483647, %v730
        %v733 = vcvt.s32.f32 %v726
        %v734 = vmul.f32 %v733, %v731
        %v735 = vxor.u32 %v734, 2147483648
        %v736 = vsel %vm653, %v735, %v734
        %v737 = vsub.s32 4, %v713
        %v738 = vsel %vm653, %v737, %v713
        %v739 = vsel %vm652, %v321, %v736
        %v740 = vsel %vm652, 0, %v738
        %v741 = vcosq.f32.pop %v739
        %v742 = vsinq.f32.pop %v739
        %vm743 = vweird.f32 %v321
        %v744 = vadd.s32 %v740, 3
        %v745 = vand.u32 %v744, 3
        %vm746 = vcmp.lt.s32.totalorder %v745, 2
        %vm747 = vcmp.eq.s32.totalorder %v745, 0
        %v748 = vxor.u32 %v742, 2147483648
        %v749 = vsel %vm747, %v741, %v748
        %vm750 = vcmp.eq.s32.totalorder %v745, 2
        %v751 = vxor.u32 %v741, 2147483648
        %v752 = vsel %vm750, %v751, %v742
        %v753 = vsel %vm746, %v749, %v752
        %v754 = vsel %vm743, nan, %v753
        %v755 = vand.u32 2147483647, %v322
        %vm756 = vcmp.le.f32.partialorder %v755, 0.7853982
        %vm757 = vcmp.lt.s32.totalorder %v322, 0
        %v758 = vand.u32 %v322, 2139095040
        %v759 = vshrl.u32 %v758, 23
        %v760 = vsub.s32 %v759, 127
        %v761 = vand.u32 2147483647, %v322
        %v762 = vand.u32 %v761, 8388607
        %v763 = vor.u32 %v762, 8388608
        %v764 = vsub.s32 0, %v763
        %v765 = vadd.s32 %v760, 1
        %vm766 = vcmp.gt.s32.totalorder %v765, 0
        %v767 = vsel %vm766, %v765, 0
        %v768 = vshrl.u32 %v767, 5
        %v769 = vand.u32 %v767, 31
        %v770 = vsub.s32 32, %v769
        %v771 = vshrl.u32 683565275, %v770
        %v772 = vshll.u32 683565275, %v769
        %v773 = vshrl.u32 2475754826, %v770
        %v774 = vor.u32 %v772, %v773
        %v775 = vshll.u32 2475754826, %v769
        %v776 = vshrl.u32 2131351028, %v770
        %v777 = vor.u32 %v775, %v776
        %v778 = vshll.u32 2131351028, %v769
        %v779 = vshrl.u32 2102212464, %v770
        %v780 = vor.u32 %v778, %v779
        %v781 = vshll.u32 2102212464, %v769
        %v782 = vshrl.u32 920167782, %v770
        %v783 = vor.u32 %v781, %v782
        %v784 = vshll.u32 920167782, %v769
        %v785 = vshrl.u32 1326507024, %v770
        %v786 = vor.u32 %v784, %v785
        %vm787 = vcmp.lt.s32.totalorder %v768, 1
        %vm788 = vcmp.lt.s32.totalorder %v768, 2
        %vm789 = vcmp.lt.s32.totalorder %v768, 3
        %vm790 = vcmp.lt.s32.totalorder %v768, 4
        %v791 = vsel %vm787, %v771, %v774
        %v792 = vsel %vm790, %v780, 2102212464
        %v793 = vsel %vm789, %v777, %v792
        %v794 = vsel %vm788, %v791, %v793
        %v795 = vsel %vm787, %v774, %v777
        %v796 = vsel %vm790, %v783, 920167782
        %v797 = vsel %vm789, %v780, %v796
        %v798 = vsel %vm788, %v795, %v797
        %v799 = vsel %vm787, %v777, %v780
        %v800 = vsel %vm790, %v786, 1326507024
        %v801 = vsel %vm789, %v783, %v800
        %v802 = vsel %vm788, %v799, %v801
        %v803 = vshll.u32 %v763, 8
        %v804 = vmul.u32.u64.compose %v803, %v802
        %v805 = vextract.low.u32 %v804
        %v806 = vextract.high.u32 %v804
        %v807 = vmul.u32.u64.compose %v803, %v798
        %v808 = vextract.low.u32 %v807
        %v809 = vextract.high.u32 %v807
        %v810 = vmul.u32 %v803, %v794
        %v811 = vadd.s32 %v806, %v808
        %vm812 = vc.u32 %v806, %v808
        %v813 = vadd.s32 %v809, 1
        %v814 = vsel %vm812, %v813, %v809
        %v815 = vadd.s32 %v810, %v814
        %v816 = vadd.s32 %v815, 536870912
        %v817 = vshrl.u32 %v816, 30
        %v818 = vshll.u32 %v817, 30
        %v819 = vsub.s32 %v815, %v818
        %vm820 = vcmp.lt.s32.totalorder %v819, 0
        %v821 = vsub.s32 0, %v819
        %v822 = vsel %vm820, %v821, %v819
        %v823 = vclz %v822
        %v824 = vsub.s32 %v823, 2
        %vm825 = vcmp.gt.s32.totalorder 0, %v824
        %v826 = vsel %vm825, 0, %v824
        %v827 = vsub.s32 32, %v826
        %v828 = vshll.u32 %v819, %v826
        %v829 = vshrl.u32 %v811, %v827
        %v830 = vor.u32 %v828, %v829
        %v831 = vsub.s32 4294967266, %v826
        %v832 = vadd.s32 %v831, 127
        %v833 = vshll.u32 %v832, 23
        %v834 = vor.u32 4788187, %v833
        %v835 = vand.u32 2147483647, %v834
        %v837 = vcvt.s32.f32 %v830
        %v838 = vmul.f32 %v837, %v835
        %v839 = vxor.u32 %v838, 2147483648
        %v840 = vsel %vm757, %v839, %v838
        %v841 = vsub.s32 4, %v817
        %v842 = vsel %vm757, %v841, %v817
        %v843 = vsel %vm756, %v322, %v840
        %v844 = vsel %vm756, 0, %v842
        %v845 = vcosq.f32.pop %v843
        %v846 = vsinq.f32.pop %v843
        %vm847 = vweird.f32 %v322
        %v848 = vadd.s32 %v844, 3
        %v849 = vand.u32 %v848, 3
        %vm850 = vcmp.lt.s32.totalorder %v849, 2
        %vm851 = vcmp.eq.s32.totalorder %v849, 0
        %v852 = vxor.u32 %v846, 2147483648
        %v853 = vsel %vm851, %v845, %v852
        %vm854 = vcmp.eq.s32.totalorder %v849, 2
        %v855 = vxor.u32 %v845, 2147483648
        %v856 = vsel %vm854, %v855, %v846
        %v857 = vsel %vm850, %v853, %v856
        %v858 = vsel %vm847, nan, %v857
        %v859 = vand.u32 2147483647, %v323
        %vm860 = vcmp.le.f32.partialorder %v859, 0.7853982
        %vm861 = vcmp.lt.s32.totalorder %v323, 0
        %v862 = vand.u32 %v323, 2139095040
        %v863 = vshrl.u32 %v862, 23
        %v864 = vsub.s32 %v863, 127
        %v865 = vand.u32 2147483647, %v323
        %v866 = vand.u32 %v865, 8388607
        %v867 = vor.u32 %v866, 8388608
        %v868 = vsub.s32 0, %v867
        %v869 = vadd.s32 %v864, 1
        %vm870 = vcmp.gt.s32.totalorder %v869, 0
        %v871 = vsel %vm870, %v869, 0
        %v872 = vshrl.u32 %v871, 5
        %v873 = vand.u32 %v871, 31
        %v874 = vsub.s32 32, %v873
        %v875 = vshrl.u32 683565275, %v874
        %v876 = vshll.u32 683565275, %v873
        %v877 = vshrl.u32 2475754826, %v874
        %v878 = vor.u32 %v876, %v877
        %v879 = vshll.u32 2475754826, %v873
        %v880 = vshrl.u32 2131351028, %v874
        %v881 = vor.u32 %v879, %v880
        %v882 = vshll.u32 2131351028, %v873
        %v883 = vshrl.u32 2102212464, %v874
        %v884 = vor.u32 %v882, %v883
        %v885 = vshll.u32 2102212464, %v873
        %v886 = vshrl.u32 920167782, %v874
        %v887 = vor.u32 %v885, %v886
        %v888 = vshll.u32 920167782, %v873
        %v889 = vshrl.u32 1326507024, %v874
        %v890 = vor.u32 %v888, %v889
        %vm891 = vcmp.lt.s32.totalorder %v872, 1
        %vm892 = vcmp.lt.s32.totalorder %v872, 2
        %vm893 = vcmp.lt.s32.totalorder %v872, 3
        %vm894 = vcmp.lt.s32.totalorder %v872, 4
        %v895 = vsel %vm891, %v875, %v878
        %v896 = vsel %vm894, %v884, 2102212464
        %v897 = vsel %vm893, %v881, %v896
        %v898 = vsel %vm892, %v895, %v897
        %v899 = vsel %vm891, %v878, %v881
        %v900 = vsel %vm894, %v887, 920167782
        %v901 = vsel %vm893, %v884, %v900
        %v902 = vsel %vm892, %v899, %v901
        %v903 = vsel %vm891, %v881, %v884
        %v904 = vsel %vm894, %v890, 1326507024
        %v905 = vsel %vm893, %v887, %v904
        %v906 = vsel %vm892, %v903, %v905
        %v907 = vshll.u32 %v867, 8
        %v908 = vmul.u32.u64.compose %v907, %v906
        %v909 = vextract.low.u32 %v908
        %v910 = vextract.high.u32 %v908
        %v911 = vmul.u32.u64.compose %v907, %v902
        %v912 = vextract.low.u32 %v911
        %v913 = vextract.high.u32 %v911
        %v914 = vmul.u32 %v907, %v898
        %v915 = vadd.s32 %v910, %v912
        %vm916 = vc.u32 %v910, %v912
        %v917 = vadd.s32 %v913, 1
        %v918 = vsel %vm916, %v917, %v913
        %v919 = vadd.s32 %v914, %v918
        %v920 = vadd.s32 %v919, 536870912
        %v921 = vshrl.u32 %v920, 30
        %v922 = vshll.u32 %v921, 30
        %v923 = vsub.s32 %v919, %v922
        %vm924 = vcmp.lt.s32.totalorder %v923, 0
        %v925 = vsub.s32 0, %v923
        %v926 = vsel %vm924, %v925, %v923
        %v927 = vclz %v926
        %v928 = vsub.s32 %v927, 2
        %vm929 = vcmp.gt.s32.totalorder 0, %v928
        %v930 = vsel %vm929, 0, %v928
        %v931 = vsub.s32 32, %v930
        %v932 = vshll.u32 %v923, %v930
        %v933 = vshrl.u32 %v915, %v931
        %v934 = vor.u32 %v932, %v933
        %v935 = vsub.s32 4294967266, %v930
        %v936 = vadd.s32 %v935, 127
        %v937 = vshll.u32 %v936, 23
        %v938 = vor.u32 4788187, %v937
        %v939 = vand.u32 2147483647, %v938
        %v941 = vcvt.s32.f32 %v934
        %v942 = vmul.f32 %v941, %v939
        %v943 = vxor.u32 %v942, 2147483648
        %v944 = vsel %vm861, %v943, %v942
        %v945 = vsub.s32 4, %v921
        %v946 = vsel %vm861, %v945, %v921
        %v947 = vsel %vm860, %v323, %v944
        %v948 = vsel %vm860, 0, %v946
        %v949 = vcosq.f32.pop %v947
        %v950 = vsinq.f32.pop %v947
        %vm951 = vweird.f32 %v323
        %v952 = vadd.s32 %v948, 3
        %v953 = vand.u32 %v952, 3
        %vm954 = vcmp.lt.s32.totalorder %v953, 2
        %vm955 = vcmp.eq.s32.totalorder %v953, 0
        %v956 = vxor.u32 %v950, 2147483648
        %v957 = vsel %vm955, %v949, %v956
        %vm958 = vcmp.eq.s32.totalorder %v953, 2
        %v959 = vxor.u32 %v949, 2147483648
        %v960 = vsel %vm958, %v959, %v950
        %v961 = vsel %vm954, %v957, %v960
        %v962 = vsel %vm951, nan, %v961
        %v963 = vand.u32 2147483647, %v324
        %vm964 = vcmp.le.f32.partialorder %v963, 0.7853982
        %vm965 = vcmp.lt.s32.totalorder %v324, 0
        %v966 = vand.u32 %v324, 2139095040
        %v967 = vshrl.u32 %v966, 23
        %v968 = vsub.s32 %v967, 127
        %v969 = vand.u32 2147483647, %v324
        %v970 = vand.u32 %v969, 8388607
        %v971 = vor.u32 %v970, 8388608
        %v972 = vsub.s32 0, %v971
        %v973 = vadd.s32 %v968, 1
        %vm974 = vcmp.gt.s32.totalorder %v973, 0
        %v975 = vsel %vm974, %v973, 0
        %v976 = vshrl.u32 %v975, 5
        %v977 = vand.u32 %v975, 31
        %v978 = vsub.s32 32, %v977
        %v979 = vshrl.u32 683565275, %v978
        %v980 = vshll.u32 683565275, %v977
        %v981 = vshrl.u32 2475754826, %v978
        %v982 = vor.u32 %v980, %v981
        %v983 = vshll.u32 2475754826, %v977
        %v984 = vshrl.u32 2131351028, %v978
        %v985 = vor.u32 %v983, %v984
        %v986 = vshll.u32 2131351028, %v977
        %v987 = vshrl.u32 2102212464, %v978
        %v988 = vor.u32 %v986, %v987
        %v989 = vshll.u32 2102212464, %v977
        %v990 = vshrl.u32 920167782, %v978
        %v991 = vor.u32 %v989, %v990
        %v992 = vshll.u32 920167782, %v977
        %v993 = vshrl.u32 1326507024, %v978
        %v994 = vor.u32 %v992, %v993
        %vm995 = vcmp.lt.s32.totalorder %v976, 1
        %vm996 = vcmp.lt.s32.totalorder %v976, 2
        %vm997 = vcmp.lt.s32.totalorder %v976, 3
        %vm998 = vcmp.lt.s32.totalorder %v976, 4
        %v999 = vsel %vm995, %v979, %v982
        %v1000 = vsel %vm998, %v988, 2102212464
        %v1001 = vsel %vm997, %v985, %v1000
        %v1002 = vsel %vm996, %v999, %v1001
        %v1003 = vsel %vm995, %v982, %v985
        %v1004 = vsel %vm998, %v991, 920167782
        %v1005 = vsel %vm997, %v988, %v1004
        %v1006 = vsel %vm996, %v1003, %v1005
        %v1007 = vsel %vm995, %v985, %v988
        %v1008 = vsel %vm998, %v994, 1326507024
        %v1009 = vsel %vm997, %v991, %v1008
        %v1010 = vsel %vm996, %v1007, %v1009
        %v1011 = vshll.u32 %v971, 8
        %v1012 = vmul.u32.u64.compose %v1011, %v1010
        %v1013 = vextract.low.u32 %v1012
        %v1014 = vextract.high.u32 %v1012
        %v1015 = vmul.u32.u64.compose %v1011, %v1006
        %v1016 = vextract.low.u32 %v1015
        %v1017 = vextract.high.u32 %v1015
        %v1018 = vmul.u32 %v1011, %v1002
        %v1019 = vadd.s32 %v1014, %v1016
        %vm1020 = vc.u32 %v1014, %v1016
        %v1021 = vadd.s32 %v1017, 1
        %v1022 = vsel %vm1020, %v1021, %v1017
        %v1023 = vadd.s32 %v1018, %v1022
        %v1024 = vadd.s32 %v1023, 536870912
        %v1025 = vshrl.u32 %v1024, 30
        %v1026 = vshll.u32 %v1025, 30
        %v1027 = vsub.s32 %v1023, %v1026
        %vm1028 = vcmp.lt.s32.totalorder %v1027, 0
        %v1029 = vsub.s32 0, %v1027
        %v1030 = vsel %vm1028, %v1029, %v1027
        %v1031 = vclz %v1030
        %v1032 = vsub.s32 %v1031, 2
        %vm1033 = vcmp.gt.s32.totalorder 0, %v1032
        %v1034 = vsel %vm1033, 0, %v1032
        %v1035 = vsub.s32 32, %v1034
        %v1036 = vshll.u32 %v1027, %v1034
        %v1037 = vshrl.u32 %v1019, %v1035
        %v1038 = vor.u32 %v1036, %v1037
        %v1039 = vsub.s32 4294967266, %v1034
        %v1040 = vadd.s32 %v1039, 127
        %v1041 = vshll.u32 %v1040, 23
        %v1042 = vor.u32 4788187, %v1041
        %v1043 = vand.u32 2147483647, %v1042
        %v1045 = vcvt.s32.f32 %v1038
        %v1046 = vmul.f32 %v1045, %v1043
        %v1047 = vxor.u32 %v1046, 2147483648
        %v1048 = vsel %vm965, %v1047, %v1046
        %v1049 = vsub.s32 4, %v1025
        %v1050 = vsel %vm965, %v1049, %v1025
        %v1051 = vsel %vm964, %v324, %v1048
        %v1052 = vsel %vm964, 0, %v1050
        %v1053 = vcosq.f32.pop %v1051
        %v1054 = vsinq.f32.pop %v1051
        %vm1055 = vweird.f32 %v324
        %v1056 = vadd.s32 %v1052, 3
        %v1057 = vand.u32 %v1056, 3
        %vm1058 = vcmp.lt.s32.totalorder %v1057, 2
        %vm1059 = vcmp.eq.s32.totalorder %v1057, 0
        %v1060 = vxor.u32 %v1054, 2147483648
        %v1061 = vsel %vm1059, %v1053, %v1060
        %vm1062 = vcmp.eq.s32.totalorder %v1057, 2
        %v1063 = vxor.u32 %v1053, 2147483648
        %v1064 = vsel %vm1062, %v1063, %v1054
        %v1065 = vsel %vm1058, %v1061, %v1064
        %v1066 = vsel %vm1055, nan, %v1065
        %v1067 = vand.u32 2147483647, %v325
        %vm1068 = vcmp.le.f32.partialorder %v1067, 0.7853982
        %vm1069 = vcmp.lt.s32.totalorder %v325, 0
        %v1070 = vand.u32 %v325, 2139095040
        %v1071 = vshrl.u32 %v1070, 23
        %v1072 = vsub.s32 %v1071, 127
        %v1073 = vand.u32 2147483647, %v325
        %v1074 = vand.u32 %v1073, 8388607
        %v1075 = vor.u32 %v1074, 8388608
        %v1076 = vsub.s32 0, %v1075
        %v1077 = vadd.s32 %v1072, 1
        %vm1078 = vcmp.gt.s32.totalorder %v1077, 0
        %v1079 = vsel %vm1078, %v1077, 0
        %v1080 = vshrl.u32 %v1079, 5
        %v1081 = vand.u32 %v1079, 31
        %v1082 = vsub.s32 32, %v1081
        %v1083 = vshrl.u32 683565275, %v1082
        %v1084 = vshll.u32 683565275, %v1081
        %v1085 = vshrl.u32 2475754826, %v1082
        %v1086 = vor.u32 %v1084, %v1085
        %v1087 = vshll.u32 2475754826, %v1081
        %v1088 = vshrl.u32 2131351028, %v1082
        %v1089 = vor.u32 %v1087, %v1088
        %v1090 = vshll.u32 2131351028, %v1081
        %v1091 = vshrl.u32 2102212464, %v1082
        %v1092 = vor.u32 %v1090, %v1091
        %v1093 = vshll.u32 2102212464, %v1081
        %v1094 = vshrl.u32 920167782, %v1082
        %v1095 = vor.u32 %v1093, %v1094
        %v1096 = vshll.u32 920167782, %v1081
        %v1097 = vshrl.u32 1326507024, %v1082
        %v1098 = vor.u32 %v1096, %v1097
        %vm1099 = vcmp.lt.s32.totalorder %v1080, 1
        %vm1100 = vcmp.lt.s32.totalorder %v1080, 2
        %vm1101 = vcmp.lt.s32.totalorder %v1080, 3
        %vm1102 = vcmp.lt.s32.totalorder %v1080, 4
        %v1103 = vsel %vm1099, %v1083, %v1086
        %v1104 = vsel %vm1102, %v1092, 2102212464
        %v1105 = vsel %vm1101, %v1089, %v1104
        %v1106 = vsel %vm1100, %v1103, %v1105
        %v1107 = vsel %vm1099, %v1086, %v1089
        %v1108 = vsel %vm1102, %v1095, 920167782
        %v1109 = vsel %vm1101, %v1092, %v1108
        %v1110 = vsel %vm1100, %v1107, %v1109
        %v1111 = vsel %vm1099, %v1089, %v1092
        %v1112 = vsel %vm1102, %v1098, 1326507024
        %v1113 = vsel %vm1101, %v1095, %v1112
        %v1114 = vsel %vm1100, %v1111, %v1113
        %v1115 = vshll.u32 %v1075, 8
        %v1116 = vmul.u32.u64.compose %v1115, %v1114
        %v1117 = vextract.low.u32 %v1116
        %v1118 = vextract.high.u32 %v1116
        %v1119 = vmul.u32.u64.compose %v1115, %v1110
        %v1120 = vextract.low.u32 %v1119
        %v1121 = vextract.high.u32 %v1119
        %v1122 = vmul.u32 %v1115, %v1106
        %v1123 = vadd.s32 %v1118, %v1120
        %vm1124 = vc.u32 %v1118, %v1120
        %v1125 = vadd.s32 %v1121, 1
        %v1126 = vsel %vm1124, %v1125, %v1121
        %v1127 = vadd.s32 %v1122, %v1126
        %v1128 = vadd.s32 %v1127, 536870912
        %v1129 = vshrl.u32 %v1128, 30
        %v1130 = vshll.u32 %v1129, 30
        %v1131 = vsub.s32 %v1127, %v1130
        %vm1132 = vcmp.lt.s32.totalorder %v1131, 0
        %v1133 = vsub.s32 0, %v1131
        %v1134 = vsel %vm1132, %v1133, %v1131
        %v1135 = vclz %v1134
        %v1136 = vsub.s32 %v1135, 2
        %vm1137 = vcmp.gt.s32.totalorder 0, %v1136
        %v1138 = vsel %vm1137, 0, %v1136
        %v1139 = vsub.s32 32, %v1138
        %v1140 = vshll.u32 %v1131, %v1138
        %v1141 = vshrl.u32 %v1123, %v1139
        %v1142 = vor.u32 %v1140, %v1141
        %v1143 = vsub.s32 4294967266, %v1138
        %v1144 = vadd.s32 %v1143, 127
        %v1145 = vshll.u32 %v1144, 23
        %v1146 = vor.u32 4788187, %v1145
        %v1147 = vand.u32 2147483647, %v1146
        %v1149 = vcvt.s32.f32 %v1142
        %v1150 = vmul.f32 %v1149, %v1147
        %v1151 = vxor.u32 %v1150, 2147483648
        %v1152 = vsel %vm1069, %v1151, %v1150
        %v1153 = vsub.s32 4, %v1129
        %v1154 = vsel %vm1069, %v1153, %v1129
        %v1155 = vsel %vm1068, %v325, %v1152
        %v1156 = vsel %vm1068, 0, %v1154
        %v1157 = vcosq.f32.pop %v1155
        %v1158 = vsinq.f32.pop %v1155
        %vm1159 = vweird.f32 %v325
        %v1160 = vadd.s32 %v1156, 3
        %v1161 = vand.u32 %v1160, 3
        %vm1162 = vcmp.lt.s32.totalorder %v1161, 2
        %vm1163 = vcmp.eq.s32.totalorder %v1161, 0
        %v1164 = vxor.u32 %v1158, 2147483648
        %v1165 = vsel %vm1163, %v1157, %v1164
        %vm1166 = vcmp.eq.s32.totalorder %v1161, 2
        %v1167 = vxor.u32 %v1157, 2147483648
        %v1168 = vsel %vm1166, %v1167, %v1158
        %v1169 = vsel %vm1162, %v1165, %v1168
        %v1170 = vsel %vm1159, nan, %v1169
        %v1171 = vand.u32 2147483647, %v326
        %vm1172 = vcmp.le.f32.partialorder %v1171, 0.7853982
        %vm1173 = vcmp.lt.s32.totalorder %v326, 0
        %v1174 = vand.u32 %v326, 2139095040
        %v1175 = vshrl.u32 %v1174, 23
        %v1176 = vsub.s32 %v1175, 127
        %v1177 = vand.u32 2147483647, %v326
        %v1178 = vand.u32 %v1177, 8388607
        %v1179 = vor.u32 %v1178, 8388608
        %v1180 = vsub.s32 0, %v1179
        %v1181 = vadd.s32 %v1176, 1
        %vm1182 = vcmp.gt.s32.totalorder %v1181, 0
        %v1183 = vsel %vm1182, %v1181, 0
        %v1184 = vshrl.u32 %v1183, 5
        %v1185 = vand.u32 %v1183, 31
        %v1186 = vsub.s32 32, %v1185
        %v1187 = vshrl.u32 683565275, %v1186
        %v1188 = vshll.u32 683565275, %v1185
        %v1189 = vshrl.u32 2475754826, %v1186
        %v1190 = vor.u32 %v1188, %v1189
        %v1191 = vshll.u32 2475754826, %v1185
        %v1192 = vshrl.u32 2131351028, %v1186
        %v1193 = vor.u32 %v1191, %v1192
        %v1194 = vshll.u32 2131351028, %v1185
        %v1195 = vshrl.u32 2102212464, %v1186
        %v1196 = vor.u32 %v1194, %v1195
        %v1197 = vshll.u32 2102212464, %v1185
        %v1198 = vshrl.u32 920167782, %v1186
        %v1199 = vor.u32 %v1197, %v1198
        %v1200 = vshll.u32 920167782, %v1185
        %v1201 = vshrl.u32 1326507024, %v1186
        %v1202 = vor.u32 %v1200, %v1201
        %vm1203 = vcmp.lt.s32.totalorder %v1184, 1
        %vm1204 = vcmp.lt.s32.totalorder %v1184, 2
        %vm1205 = vcmp.lt.s32.totalorder %v1184, 3
        %vm1206 = vcmp.lt.s32.totalorder %v1184, 4
        %v1207 = vsel %vm1203, %v1187, %v1190
        %v1208 = vsel %vm1206, %v1196, 2102212464
        %v1209 = vsel %vm1205, %v1193, %v1208
        %v1210 = vsel %vm1204, %v1207, %v1209
        %v1211 = vsel %vm1203, %v1190, %v1193
        %v1212 = vsel %vm1206, %v1199, 920167782
        %v1213 = vsel %vm1205, %v1196, %v1212
        %v1214 = vsel %vm1204, %v1211, %v1213
        %v1215 = vsel %vm1203, %v1193, %v1196
        %v1216 = vsel %vm1206, %v1202, 1326507024
        %v1217 = vsel %vm1205, %v1199, %v1216
        %v1218 = vsel %vm1204, %v1215, %v1217
        %v1219 = vshll.u32 %v1179, 8
        %v1220 = vmul.u32.u64.compose %v1219, %v1218
        %v1221 = vextract.low.u32 %v1220
        %v1222 = vextract.high.u32 %v1220
        %v1223 = vmul.u32.u64.compose %v1219, %v1214
        %v1224 = vextract.low.u32 %v1223
        %v1225 = vextract.high.u32 %v1223
        %v1226 = vmul.u32 %v1219, %v1210
        %v1227 = vadd.s32 %v1222, %v1224
        %vm1228 = vc.u32 %v1222, %v1224
        %v1229 = vadd.s32 %v1225, 1
        %v1230 = vsel %vm1228, %v1229, %v1225
        %v1231 = vadd.s32 %v1226, %v1230
        %v1232 = vadd.s32 %v1231, 536870912
        %v1233 = vshrl.u32 %v1232, 30
        %v1234 = vshll.u32 %v1233, 30
        %v1235 = vsub.s32 %v1231, %v1234
        %vm1236 = vcmp.lt.s32.totalorder %v1235, 0
        %v1237 = vsub.s32 0, %v1235
        %v1238 = vsel %vm1236, %v1237, %v1235
        %v1239 = vclz %v1238
        %v1240 = vsub.s32 %v1239, 2
        %vm1241 = vcmp.gt.s32.totalorder 0, %v1240
        %v1242 = vsel %vm1241, 0, %v1240
        %v1243 = vsub.s32 32, %v1242
        %v1244 = vshll.u32 %v1235, %v1242
        %v1245 = vshrl.u32 %v1227, %v1243
        %v1246 = vor.u32 %v1244, %v1245
        %v1247 = vsub.s32 4294967266, %v1242
        %v1248 = vadd.s32 %v1247, 127
        %v1249 = vshll.u32 %v1248, 23
        %v1250 = vor.u32 4788187, %v1249
        %v1251 = vand.u32 2147483647, %v1250
        %v1253 = vcvt.s32.f32 %v1246
        %v1254 = vmul.f32 %v1253, %v1251
        %v1255 = vxor.u32 %v1254, 2147483648
        %v1256 = vsel %vm1173, %v1255, %v1254
        %v1257 = vsub.s32 4, %v1233
        %v1258 = vsel %vm1173, %v1257, %v1233
        %v1259 = vsel %vm1172, %v326, %v1256
        %v1260 = vsel %vm1172, 0, %v1258
        %v1261 = vcosq.f32.pop %v1259
        %v1262 = vsinq.f32.pop %v1259
        %vm1263 = vweird.f32 %v326
        %v1264 = vadd.s32 %v1260, 3
        %v1265 = vand.u32 %v1264, 3
        %vm1266 = vcmp.lt.s32.totalorder %v1265, 2
        %vm1267 = vcmp.eq.s32.totalorder %v1265, 0
        %v1268 = vxor.u32 %v1262, 2147483648
        %v1269 = vsel %vm1267, %v1261, %v1268
        %vm1270 = vcmp.eq.s32.totalorder %v1265, 2
        %v1271 = vxor.u32 %v1261, 2147483648
        %v1272 = vsel %vm1270, %v1271, %v1262
        %v1273 = vsel %vm1266, %v1269, %v1272
        %v1274 = vsel %vm1263, nan, %v1273
        %v1275 = vand.u32 2147483647, %v327
        %vm1276 = vcmp.le.f32.partialorder %v1275, 0.7853982
        %vm1277 = vcmp.lt.s32.totalorder %v327, 0
        %v1278 = vand.u32 %v327, 2139095040
        %v1279 = vshrl.u32 %v1278, 23
        %v1280 = vsub.s32 %v1279, 127
        %v1281 = vand.u32 2147483647, %v327
        %v1282 = vand.u32 %v1281, 8388607
        %v1283 = vor.u32 %v1282, 8388608
        %v1284 = vsub.s32 0, %v1283
        %v1285 = vadd.s32 %v1280, 1
        %vm1286 = vcmp.gt.s32.totalorder %v1285, 0
        %v1287 = vsel %vm1286, %v1285, 0
        %v1288 = vshrl.u32 %v1287, 5
        %v1289 = vand.u32 %v1287, 31
        %v1290 = vsub.s32 32, %v1289
        %v1291 = vshrl.u32 683565275, %v1290
        %v1292 = vshll.u32 683565275, %v1289
        %v1293 = vshrl.u32 2475754826, %v1290
        %v1294 = vor.u32 %v1292, %v1293
        %v1295 = vshll.u32 2475754826, %v1289
        %v1296 = vshrl.u32 2131351028, %v1290
        %v1297 = vor.u32 %v1295, %v1296
        %v1298 = vshll.u32 2131351028, %v1289
        %v1299 = vshrl.u32 2102212464, %v1290
        %v1300 = vor.u32 %v1298, %v1299
        %v1301 = vshll.u32 2102212464, %v1289
        %v1302 = vshrl.u32 920167782, %v1290
        %v1303 = vor.u32 %v1301, %v1302
        %v1304 = vshll.u32 920167782, %v1289
        %v1305 = vshrl.u32 1326507024, %v1290
        %v1306 = vor.u32 %v1304, %v1305
        %vm1307 = vcmp.lt.s32.totalorder %v1288, 1
        %vm1308 = vcmp.lt.s32.totalorder %v1288, 2
        %vm1309 = vcmp.lt.s32.totalorder %v1288, 3
        %vm1310 = vcmp.lt.s32.totalorder %v1288, 4
        %v1311 = vsel %vm1307, %v1291, %v1294
        %v1312 = vsel %vm1310, %v1300, 2102212464
        %v1313 = vsel %vm1309, %v1297, %v1312
        %v1314 = vsel %vm1308, %v1311, %v1313
        %v1315 = vsel %vm1307, %v1294, %v1297
        %v1316 = vsel %vm1310, %v1303, 920167782
        %v1317 = vsel %vm1309, %v1300, %v1316
        %v1318 = vsel %vm1308, %v1315, %v1317
        %v1319 = vsel %vm1307, %v1297, %v1300
        %v1320 = vsel %vm1310, %v1306, 1326507024
        %v1321 = vsel %vm1309, %v1303, %v1320
        %v1322 = vsel %vm1308, %v1319, %v1321
        %v1323 = vshll.u32 %v1283, 8
        %v1324 = vmul.u32.u64.compose %v1323, %v1322
        %v1325 = vextract.low.u32 %v1324
        %v1326 = vextract.high.u32 %v1324
        %v1327 = vmul.u32.u64.compose %v1323, %v1318
        %v1328 = vextract.low.u32 %v1327
        %v1329 = vextract.high.u32 %v1327
        %v1330 = vmul.u32 %v1323, %v1314
        %v1331 = vadd.s32 %v1326, %v1328
        %vm1332 = vc.u32 %v1326, %v1328
        %v1333 = vadd.s32 %v1329, 1
        %v1334 = vsel %vm1332, %v1333, %v1329
        %v1335 = vadd.s32 %v1330, %v1334
        %v1336 = vadd.s32 %v1335, 536870912
        %v1337 = vshrl.u32 %v1336, 30
        %v1338 = vshll.u32 %v1337, 30
        %v1339 = vsub.s32 %v1335, %v1338
        %vm1340 = vcmp.lt.s32.totalorder %v1339, 0
        %v1341 = vsub.s32 0, %v1339
        %v1342 = vsel %vm1340, %v1341, %v1339
        %v1343 = vclz %v1342
        %v1344 = vsub.s32 %v1343, 2
        %vm1345 = vcmp.gt.s32.totalorder 0, %v1344
        %v1346 = vsel %vm1345, 0, %v1344
        %v1347 = vsub.s32 32, %v1346
        %v1348 = vshll.u32 %v1339, %v1346
        %v1349 = vshrl.u32 %v1331, %v1347
        %v1350 = vor.u32 %v1348, %v1349
        %v1351 = vsub.s32 4294967266, %v1346
        %v1352 = vadd.s32 %v1351, 127
        %v1353 = vshll.u32 %v1352, 23
        %v1354 = vor.u32 4788187, %v1353
        %v1355 = vand.u32 2147483647, %v1354
        %v1357 = vcvt.s32.f32 %v1350
        %v1358 = vmul.f32 %v1357, %v1355
        %v1359 = vxor.u32 %v1358, 2147483648
        %v1360 = vsel %vm1277, %v1359, %v1358
        %v1361 = vsub.s32 4, %v1337
        %v1362 = vsel %vm1277, %v1361, %v1337
        %v1363 = vsel %vm1276, %v327, %v1360
        %v1364 = vsel %vm1276, 0, %v1362
        %v1365 = vcosq.f32.pop %v1363
        %v1366 = vsinq.f32.pop %v1363
        %vm1367 = vweird.f32 %v327
        %v1368 = vadd.s32 %v1364, 3
        %v1369 = vand.u32 %v1368, 3
        %vm1370 = vcmp.lt.s32.totalorder %v1369, 2
        %vm1371 = vcmp.eq.s32.totalorder %v1369, 0
        %v1372 = vxor.u32 %v1366, 2147483648
        %v1373 = vsel %vm1371, %v1365, %v1372
        %vm1374 = vcmp.eq.s32.totalorder %v1369, 2
        %v1375 = vxor.u32 %v1365, 2147483648
        %v1376 = vsel %vm1374, %v1375, %v1366
        %v1377 = vsel %vm1370, %v1373, %v1376
        %v1378 = vsel %vm1367, nan, %v1377
        %v1379 = vsel %vm334, %v318, %v442
        %v1380 = vsel %vm334, %v319, %v546
        %v1381 = vsel %vm335, %v320, %v650
        %v1382 = vsel %vm335, %v321, %v754
        %v1383 = vsel %vm336, %v322, %v858
        %v1384 = vsel %vm336, %v323, %v962
        %v1385 = vsel %vm337, %v324, %v1066
        %v1386 = vsel %vm337, %v325, %v1170
        %v1387 = vsel %vm338, %v326, %v1274
        %v1388 = vsel %vm338, %v327, %v1378
        %v1389 = vld [vmem:[%s1] sm:$0xf]
        %v1390 = vld [vmem:[%s1 + $0x4] sm:$0xf]
        %v1391 = vld [vmem:[%s1 + $0x8] sm:$0xf]
        %v1392 = vld [vmem:[%s1 + $0xc] sm:$0xf]
        %v1393 = vld [vmem:[%s1 + $0x10] sm:$0xf]
        %v1394 = vld [vmem:[%s1 + $0x14] sm:$0xf]
        %v1395 = vld [vmem:[%s1 + $0x18] sm:$0xf]
        %v1396 = vld [vmem:[%s1 + $0x1c] sm:$0xf]
        %v1397 = vld [vmem:[%s1 + $0x20] sm:$0xf]
        %v1398 = vld [vmem:[%s1 + $0x24] sm:$0xf]
        %v1399 = vld [vmem:[%s1 + $0x28] sm:$0xf]
        %v1400 = vld [vmem:[%s1 + $0x2c] sm:$0xf]
        %v1401 = vld [vmem:[%s1 + $0x30] sm:$0xf]
        %v1402 = vld [vmem:[%s1 + $0x34] sm:$0xf]
        %v1403 = vld [vmem:[%s1 + $0x38] sm:$0xf]
        %v1404 = vld [vmem:[%s1 + $0x3c] sm:$0xf]
        %v1405 = vpack.c.bf16 %v1381, %v1379
        %v1406 = vpack.c.bf16 %v1382, %v1380
        %v1407 = vpack.c.bf16 %v1385, %v1383
        %v1408 = vpack.c.bf16 %v1386, %v1384
        %v1409 = vpack.c.bf16 %v1387, %v1387
        %v1410 = vpack.c.bf16 %v1388, %v1388
        %v1411 = vld [vmem:[%s2] sm:$0xff]
        %v1412 = vld [vmem:[%s2 + $0x8] sm:$0xff]
        %v1413 = vld [vmem:[%s2 + $0x10] sm:$0xff]
        %v1414 = vld [vmem:[%s2 + $0x18] sm:$0xff]
        %v1415 = vld [vmem:[%s2 + $0x20] sm:$0xff]
        %v1416 = vld [vmem:[%s2 + $0x28] sm:$0xff]
        %v1417 = vld [vmem:[%s2 + $0x30] sm:$0xff]
        %v1418 = vld [vmem:[%s2 + $0x38] sm:$0xff]
        %v1419 = vld [vmem:[%s2 + $0x40] sm:$0xff]
        %v1420 = vld [vmem:[%s2 + $0x48] sm:$0xff]
        %v1421 = vld [vmem:[%s2 + $0x50] sm:$0xff]
        %v1422 = vld [vmem:[%s2 + $0x58] sm:$0xff]
        %v1423 = vld [vmem:[%s2 + $0x60] sm:$0xff]
        %v1424 = vld [vmem:[%s2 + $0x68] sm:$0xff]
        %v1425 = vld [vmem:[%s2 + $0x70] sm:$0xff]
        %v1426 = vld [vmem:[%s2 + $0x78] sm:$0xff]
        %1428 = vset.pattern.permute.xlu0 0
        %1429 = vperm.xlu0 %1428, %v1411
        %v1430 = vpop.permute.xlu0 %1429
        %1433 = vset.pattern.permute.xlu0 0
        %1434 = vperm.xlu0 %1433, %v1412
        %v1435 = vpop.permute.xlu0 %1434
        %1438 = vset.pattern.permute.xlu0 0
        %1439 = vperm.xlu0 %1438, %v1413
        %v1440 = vpop.permute.xlu0 %1439
        %1443 = vset.pattern.permute.xlu0 0
        %1444 = vperm.xlu0 %1443, %v1414
        %v1445 = vpop.permute.xlu0 %1444
        %1448 = vset.pattern.permute.xlu0 0
        %1449 = vperm.xlu0 %1448, %v1415
        %v1450 = vpop.permute.xlu0 %1449
        %1453 = vset.pattern.permute.xlu0 0
        %1454 = vperm.xlu0 %1453, %v1416
        %v1455 = vpop.permute.xlu0 %1454
        %1458 = vset.pattern.permute.xlu0 0
        %1459 = vperm.xlu0 %1458, %v1417
        %v1460 = vpop.permute.xlu0 %1459
        %1463 = vset.pattern.permute.xlu0 0
        %1464 = vperm.xlu0 %1463, %v1418
        %v1465 = vpop.permute.xlu0 %1464
        %1468 = vset.pattern.permute.xlu0 0
        %1469 = vperm.xlu0 %1468, %v1419
        %v1470 = vpop.permute.xlu0 %1469
        %1473 = vset.pattern.permute.xlu0 0
        %1474 = vperm.xlu0 %1473, %v1420
        %v1475 = vpop.permute.xlu0 %1474
        %1478 = vset.pattern.permute.xlu0 0
        %1479 = vperm.xlu0 %1478, %v1421
        %v1480 = vpop.permute.xlu0 %1479
        %1483 = vset.pattern.permute.xlu0 0
        %1484 = vperm.xlu0 %1483, %v1422
        %v1485 = vpop.permute.xlu0 %1484
        %1488 = vset.pattern.permute.xlu0 0
        %1489 = vperm.xlu0 %1488, %v1423
        %v1490 = vpop.permute.xlu0 %1489
        %1493 = vset.pattern.permute.xlu0 0
        %1494 = vperm.xlu0 %1493, %v1424
        %v1495 = vpop.permute.xlu0 %1494
        %1498 = vset.pattern.permute.xlu0 0
        %1499 = vperm.xlu0 %1498, %v1425
        %v1500 = vpop.permute.xlu0 %1499
        %1503 = vset.pattern.permute.xlu0 0
        %1504 = vperm.xlu0 %1503, %v1426
        %v1505 = vpop.permute.xlu0 %1504
        %v1523 = vunpack.c.l.b16 %v1389
        %v1524 = vunpack.c.l.b16 %v1390
        %v1525 = vunpack.c.l.b16 %v1391
        %v1526 = vunpack.c.l.b16 %v1392
        %v1527 = vunpack.c.l.b16 %v1393
        %v1528 = vunpack.c.l.b16 %v1394
        %v1529 = vunpack.c.l.b16 %v1395
        %v1530 = vunpack.c.l.b16 %v1396
        %v1531 = vunpack.c.l.b16 %v1397
        %v1532 = vunpack.c.l.b16 %v1398
        %v1533 = vunpack.c.l.b16 %v1399
        %v1534 = vunpack.c.l.b16 %v1400
        %v1535 = vunpack.c.l.b16 %v1401
        %v1536 = vunpack.c.l.b16 %v1402
        %v1537 = vunpack.c.l.b16 %v1403
        %v1538 = vunpack.c.l.b16 %v1404
        %v1539 = vpack.c.b16 %v1524, %v1523
        %v1540 = vpack.c.b16 %v1526, %v1525
        %v1541 = vpack.c.b16 %v1528, %v1527
        %v1542 = vpack.c.b16 %v1530, %v1529
        %v1543 = vpack.c.b16 %v1532, %v1531
        %v1544 = vpack.c.b16 %v1534, %v1533
        %v1545 = vpack.c.b16 %v1536, %v1535
        %v1546 = vpack.c.b16 %v1538, %v1537
        %vm1547 = vcmask 277504
        %v1549 = vsel %vm1547, %v1539, 0
        %v1552 = vsel %vm1547, %v1540, 0
        %v1555 = vsel %vm1547, %v1541, 0
        %v1558 = vsel %vm1547, %v1542, 0
        %v1561 = vsel %vm1547, %v1543, 0
        %v1564 = vsel %vm1547, %v1544, 0
        %v1567 = vsel %vm1547, %v1545, 0
        %v1570 = vsel %vm1547, %v1546, 0
        %vm1572 = vcmask 1040384
        %v1574 = vsel %vm1572, %v1409, 0
        %v1577 = vsel %vm1572, %v1410, 0
        %1579 = vmatprep.subr.bf16.mxu0 %v1406
        %1580 = vmatpush1.bf16.msra.mxu0 %v1405
        %1581 = vmatprep.subr.bf16.mxu0 %v1408
        %1582 = vmatpush1.bf16.msra.mxu0 %v1407
        %1583 = vmatprep.subr.bf16.mxu0 %v1577
        %1584 = vmatpush1.bf16.msra.mxu0 %v1574
        %1585 = vmatprep.subr.bf16.mxu0 0
        %1586 = vmatpush1.bf16.msra.mxu0 0
        %1587 = vmatprep.subr.bf16.mxu0 0
        %1588 = vmatpush1.bf16.msra.mxu0 0
        %1589 = vmatprep.subr.bf16.mxu0 0
        %1590 = vmatpush1.bf16.msra.mxu0 0
        %1591 = vmatprep.subr.bf16.mxu0 0
        %1592 = vmatpush1.bf16.msra.mxu0 0
        %1593 = vmatprep.subr.bf16.mxu0 0
        %1594 = vmatpush1.bf16.msra.mxu0 0
        %1595 = vmatprep.subr.bf16.mxu0 0
        %1596 = vmatpush1.bf16.msra.mxu0 0
        %1597 = vmatprep.subr.bf16.mxu0 0
        %1598 = vmatpush1.bf16.msra.mxu0 0
        %1599 = vmatprep.subr.bf16.mxu0 0
        %1600 = vmatpush1.bf16.msra.mxu0 0
        %1601 = vmatprep.subr.bf16.mxu0 0
        %1602 = vmatpush1.bf16.msra.mxu0 0
        %1603 = vmatprep.subr.bf16.mxu0 0
        %1604 = vmatpush1.bf16.msra.mxu0 0
        %1605 = vmatprep.subr.bf16.mxu0 0
        %1606 = vmatpush1.bf16.msra.mxu0 0
        %1607 = vmatprep.subr.bf16.mxu0 0
        %1608 = vmatpush1.bf16.msra.mxu0 0
        %1609 = vmatprep.subr.bf16.mxu0 0
        %1610 = vmatpush1.bf16.msra.mxu0 0
        %1611 = vmatprep.mubr.bf16.mxu0 0
        %1612 = vmatmul.mubr.bf16.gmra.mrb[0].mxu0 %v1549
        %v1613 = vpop.f32.mrb[0].mxu0
        %v1614 = vadd.f32 %v1430, %v1613
        %v1615 = vpop.f32.mrb[0].mxu0
        %v1616 = vadd.f32 %v1430, %v1615
        %v1617 = vpop.f32.mrb[0].mxu0
        %v1618 = vadd.f32 %v1435, %v1617
        %v1619 = vpop.f32.mrb[0].mxu0
        %v1620 = vadd.f32 %v1435, %v1619
        %1621 = vmatprep.mubr.bf16.mxu0 0
        %1622 = vmatmul.mubr.bf16.gmra.mrb[0].mxu0 %v1552
        %v1623 = vpop.f32.mrb[0].mxu0
        %v1624 = vadd.f32 %v1440, %v1623
        %v1625 = vpop.f32.mrb[0].mxu0
        %v1626 = vadd.f32 %v1440, %v1625
        %v1627 = vpop.f32.mrb[0].mxu0
        %v1628 = vadd.f32 %v1445, %v1627
        %v1629 = vpop.f32.mrb[0].mxu0
        %v1630 = vadd.f32 %v1445, %v1629
        %1631 = vmatprep.mubr.bf16.mxu0 0
        %1632 = vmatmul.mubr.bf16.gmra.mrb[0].mxu0 %v1555
        %v1633 = vpop.f32.mrb[0].mxu0
        %v1634 = vadd.f32 %v1450, %v1633
        %v1635 = vpop.f32.mrb[0].mxu0
        %v1636 = vadd.f32 %v1450, %v1635
        %v1637 = vpop.f32.mrb[0].mxu0
        %v1638 = vadd.f32 %v1455, %v1637
        %v1639 = vpop.f32.mrb[0].mxu0
        %v1640 = vadd.f32 %v1455, %v1639
        %1641 = vmatprep.mubr.bf16.mxu0 0
        %1642 = vmatmul.mubr.bf16.gmra.mrb[0].mxu0 %v1558
        %v1643 = vpop.f32.mrb[0].mxu0
        %v1644 = vadd.f32 %v1460, %v1643
        %v1645 = vpop.f32.mrb[0].mxu0
        %v1646 = vadd.f32 %v1460, %v1645
        %v1647 = vpop.f32.mrb[0].mxu0
        %v1648 = vadd.f32 %v1465, %v1647
        %v1649 = vpop.f32.mrb[0].mxu0
        %v1650 = vadd.f32 %v1465, %v1649
        %1651 = vmatprep.mubr.bf16.mxu0 0
        %1652 = vmatmul.mubr.bf16.gmra.mrb[0].mxu0 %v1561
        %v1653 = vpop.f32.mrb[0].mxu0
        %v1654 = vadd.f32 %v1470, %v1653
        %v1655 = vpop.f32.mrb[0].mxu0
        %v1656 = vadd.f32 %v1470, %v1655
        %v1657 = vpop.f32.mrb[0].mxu0
        %v1658 = vadd.f32 %v1475, %v1657
        %v1659 = vpop.f32.mrb[0].mxu0
        %v1660 = vadd.f32 %v1475, %v1659
        %1661 = vmatprep.mubr.bf16.mxu0 0
        %1662 = vmatmul.mubr.bf16.gmra.mrb[0].mxu0 %v1564
        %v1663 = vpop.f32.mrb[0].mxu0
        %v1664 = vadd.f32 %v1480, %v1663
        %v1665 = vpop.f32.mrb[0].mxu0
        %v1666 = vadd.f32 %v1480, %v1665
        %v1667 = vpop.f32.mrb[0].mxu0
        %v1668 = vadd.f32 %v1485, %v1667
        %v1669 = vpop.f32.mrb[0].mxu0
        %v1670 = vadd.f32 %v1485, %v1669
        %1671 = vmatprep.mubr.bf16.mxu0 0
        %1672 = vmatmul.mubr.bf16.gmra.mrb[0].mxu0 %v1567
        %v1673 = vpop.f32.mrb[0].mxu0
        %v1674 = vadd.f32 %v1490, %v1673
        %v1675 = vpop.f32.mrb[0].mxu0
        %v1676 = vadd.f32 %v1490, %v1675
        %v1677 = vpop.f32.mrb[0].mxu0
        %v1678 = vadd.f32 %v1495, %v1677
        %v1679 = vpop.f32.mrb[0].mxu0
        %v1680 = vadd.f32 %v1495, %v1679
        %1681 = vmatprep.mubr.bf16.mxu0 0
        %1682 = vmatmul.mubr.bf16.gmra.mrb[0].mxu0 %v1570
        %v1683 = vpop.f32.mrb[0].mxu0
        %v1684 = vadd.f32 %v1500, %v1683
        %v1685 = vpop.f32.mrb[0].mxu0
        %v1686 = vadd.f32 %v1500, %v1685
        %v1687 = vpop.f32.mrb[0].mxu0
        %v1688 = vadd.f32 %v1505, %v1687
        %v1689 = vpop.f32.mrb[0].mxu0
        %v1690 = vadd.f32 %v1505, %v1689
        %1691 = vdwg.mxu0
        %v1692 = vmax.f32 %v1614, 0.0
        %v1693 = vmax.f32 %v1616, 0.0
        %v1694 = vmax.f32 %v1618, 0.0
        %v1695 = vmax.f32 %v1620, 0.0
        %v1696 = vmax.f32 %v1624, 0.0
        %v1697 = vmax.f32 %v1626, 0.0
        %v1698 = vmax.f32 %v1628, 0.0
        %v1699 = vmax.f32 %v1630, 0.0
        %v1700 = vmax.f32 %v1634, 0.0
        %v1701 = vmax.f32 %v1636, 0.0
        %v1702 = vmax.f32 %v1638, 0.0
        %v1703 = vmax.f32 %v1640, 0.0
        %v1704 = vmax.f32 %v1644, 0.0
        %v1705 = vmax.f32 %v1646, 0.0
        %v1706 = vmax.f32 %v1648, 0.0
        %v1707 = vmax.f32 %v1650, 0.0
        %v1708 = vmax.f32 %v1654, 0.0
        %v1709 = vmax.f32 %v1656, 0.0
        %v1710 = vmax.f32 %v1658, 0.0
        %v1711 = vmax.f32 %v1660, 0.0
        %v1712 = vmax.f32 %v1664, 0.0
        %v1713 = vmax.f32 %v1666, 0.0
        %v1714 = vmax.f32 %v1668, 0.0
        %v1715 = vmax.f32 %v1670, 0.0
        %v1716 = vmax.f32 %v1674, 0.0
        %v1717 = vmax.f32 %v1676, 0.0
        %v1718 = vmax.f32 %v1678, 0.0
        %v1719 = vmax.f32 %v1680, 0.0
        %v1720 = vmax.f32 %v1684, 0.0
        %v1721 = vmax.f32 %v1686, 0.0
        %v1722 = vmax.f32 %v1688, 0.0
        %v1723 = vmax.f32 %v1690, 0.0
        %v1724 = vld [vmem:[%s3] sm:$0xf]
        %v1725 = vld [vmem:[%s3 + $0x4] sm:$0xf]
        %v1726 = vld [vmem:[%s3 + $0x8] sm:$0xf]
        %v1727 = vld [vmem:[%s3 + $0xc] sm:$0xf]
        %v1728 = vld [vmem:[%s3 + $0x10] sm:$0xf]
        %v1729 = vld [vmem:[%s3 + $0x14] sm:$0xf]
        %v1730 = vld [vmem:[%s3 + $0x18] sm:$0xf]
        %v1731 = vld [vmem:[%s3 + $0x1c] sm:$0xf]
        %v1732 = vld [vmem:[%s3 + $0x20] sm:$0xf]
        %v1733 = vld [vmem:[%s3 + $0x24] sm:$0xf]
        %v1734 = vld [vmem:[%s3 + $0x28] sm:$0xf]
        %v1735 = vld [vmem:[%s3 + $0x2c] sm:$0xf]
        %v1736 = vld [vmem:[%s3 + $0x30] sm:$0xf]
        %v1737 = vld [vmem:[%s3 + $0x34] sm:$0xf]
        %v1738 = vld [vmem:[%s3 + $0x38] sm:$0xf]
        %v1739 = vld [vmem:[%s3 + $0x3c] sm:$0xf]
        %v1740 = vpack.c.bf16 %v1694, %v1692
        %v1741 = vpack.c.bf16 %v1695, %v1693
        %v1742 = vpack.c.bf16 %v1698, %v1696
        %v1743 = vpack.c.bf16 %v1699, %v1697
        %v1744 = vpack.c.bf16 %v1702, %v1700
        %v1745 = vpack.c.bf16 %v1703, %v1701
        %v1746 = vpack.c.bf16 %v1706, %v1704
        %v1747 = vpack.c.bf16 %v1707, %v1705
        %v1748 = vpack.c.bf16 %v1710, %v1708
        %v1749 = vpack.c.bf16 %v1711, %v1709
        %v1750 = vpack.c.bf16 %v1714, %v1712
        %v1751 = vpack.c.bf16 %v1715, %v1713
        %v1752 = vpack.c.bf16 %v1718, %v1716
        %v1753 = vpack.c.bf16 %v1719, %v1717
        %v1754 = vpack.c.bf16 %v1722, %v1720
        %v1755 = vpack.c.bf16 %v1723, %v1721
        %v1756 = vld [vmem:[%s4] sm:$0xff]
        %v1757 = vld [vmem:[%s4 + $0x8] sm:$0xff]
        %v1758 = vld [vmem:[%s4 + $0x10] sm:$0xff]
        %v1759 = vld [vmem:[%s4 + $0x18] sm:$0xff]
        %v1760 = vld [vmem:[%s4 + $0x20] sm:$0xff]
        %v1761 = vld [vmem:[%s4 + $0x28] sm:$0xff]
        %v1762 = vld [vmem:[%s4 + $0x30] sm:$0xff]
        %v1763 = vld [vmem:[%s4 + $0x38] sm:$0xff]
        %v1764 = vld [vmem:[%s4 + $0x40] sm:$0xff]
        %v1765 = vld [vmem:[%s4 + $0x48] sm:$0xff]
        %v1766 = vld [vmem:[%s4 + $0x50] sm:$0xff]
        %v1767 = vld [vmem:[%s4 + $0x58] sm:$0xff]
        %v1768 = vld [vmem:[%s4 + $0x60] sm:$0xff]
        %v1769 = vld [vmem:[%s4 + $0x68] sm:$0xff]
        %v1770 = vld [vmem:[%s4 + $0x70] sm:$0xff]
        %v1771 = vld [vmem:[%s4 + $0x78] sm:$0xff]
        %1773 = vset.pattern.permute.xlu0 0
        %1774 = vperm.xlu0 %1773, %v1756
        %v1775 = vpop.permute.xlu0 %1774
        %1778 = vset.pattern.permute.xlu0 0
        %1779 = vperm.xlu0 %1778, %v1757
        %v1780 = vpop.permute.xlu0 %1779
        %1783 = vset.pattern.permute.xlu0 0
        %1784 = vperm.xlu0 %1783, %v1758
        %v1785 = vpop.permute.xlu0 %1784
        %1788 = vset.pattern.permute.xlu0 0
        %1789 = vperm.xlu0 %1788, %v1759
        %v1790 = vpop.permute.xlu0 %1789
        %1793 = vset.pattern.permute.xlu0 0
        %1794 = vperm.xlu0 %1793, %v1760
        %v1795 = vpop.permute.xlu0 %1794
        %1798 = vset.pattern.permute.xlu0 0
        %1799 = vperm.xlu0 %1798, %v1761
        %v1800 = vpop.permute.xlu0 %1799
        %1803 = vset.pattern.permute.xlu0 0
        %1804 = vperm.xlu0 %1803, %v1762
        %v1805 = vpop.permute.xlu0 %1804
        %1808 = vset.pattern.permute.xlu0 0
        %1809 = vperm.xlu0 %1808, %v1763
        %v1810 = vpop.permute.xlu0 %1809
        %1813 = vset.pattern.permute.xlu0 0
        %1814 = vperm.xlu0 %1813, %v1764
        %v1815 = vpop.permute.xlu0 %1814
        %1818 = vset.pattern.permute.xlu0 0
        %1819 = vperm.xlu0 %1818, %v1765
        %v1820 = vpop.permute.xlu0 %1819
        %1823 = vset.pattern.permute.xlu0 0
        %1824 = vperm.xlu0 %1823, %v1766
        %v1825 = vpop.permute.xlu0 %1824
        %1828 = vset.pattern.permute.xlu0 0
        %1829 = vperm.xlu0 %1828, %v1767
        %v1830 = vpop.permute.xlu0 %1829
        %1833 = vset.pattern.permute.xlu0 0
        %1834 = vperm.xlu0 %1833, %v1768
        %v1835 = vpop.permute.xlu0 %1834
        %1838 = vset.pattern.permute.xlu0 0
        %1839 = vperm.xlu0 %1838, %v1769
        %v1840 = vpop.permute.xlu0 %1839
        %1843 = vset.pattern.permute.xlu0 0
        %1844 = vperm.xlu0 %1843, %v1770
        %v1845 = vpop.permute.xlu0 %1844
        %1848 = vset.pattern.permute.xlu0 0
        %1849 = vperm.xlu0 %1848, %v1771
        %v1850 = vpop.permute.xlu0 %1849
        %v1868 = vunpack.c.l.b16 %v1724
        %v1869 = vunpack.c.l.b16 %v1725
        %v1870 = vunpack.c.l.b16 %v1726
        %v1871 = vunpack.c.l.b16 %v1727
        %v1872 = vunpack.c.l.b16 %v1728
        %v1873 = vunpack.c.l.b16 %v1729
        %v1874 = vunpack.c.l.b16 %v1730
        %v1875 = vunpack.c.l.b16 %v1731
        %v1876 = vunpack.c.l.b16 %v1732
        %v1877 = vunpack.c.l.b16 %v1733
        %v1878 = vunpack.c.l.b16 %v1734
        %v1879 = vunpack.c.l.b16 %v1735
        %v1880 = vunpack.c.l.b16 %v1736
        %v1881 = vunpack.c.l.b16 %v1737
        %v1882 = vunpack.c.l.b16 %v1738
        %v1883 = vunpack.c.l.b16 %v1739
        %v1884 = vpack.c.b16 %v1869, %v1868
        %v1885 = vpack.c.b16 %v1871, %v1870
        %v1886 = vpack.c.b16 %v1873, %v1872
        %v1887 = vpack.c.b16 %v1875, %v1874
        %v1888 = vpack.c.b16 %v1877, %v1876
        %v1889 = vpack.c.b16 %v1879, %v1878
        %v1890 = vpack.c.b16 %v1881, %v1880
        %v1891 = vpack.c.b16 %v1883, %v1882
        %1900 = vmatprep.subr.bf16.mxu0 %v1741
        %1901 = vmatpush1.bf16.msra.mxu0 %v1740
        %1902 = vmatprep.subr.bf16.mxu0 %v1743
        %1903 = vmatpush1.bf16.msra.mxu0 %v1742
        %1904 = vmatprep.subr.bf16.mxu0 %v1745
        %1905 = vmatpush1.bf16.msra.mxu0 %v1744
        %1906 = vmatprep.subr.bf16.mxu0 %v1747
        %1907 = vmatpush1.bf16.msra.mxu0 %v1746
        %1908 = vmatprep.subr.bf16.mxu0 %v1749
        %1909 = vmatpush1.bf16.msra.mxu0 %v1748
        %1910 = vmatprep.subr.bf16.mxu0 %v1751
        %1911 = vmatpush1.bf16.msra.mxu0 %v1750
        %1912 = vmatprep.subr.bf16.mxu0 %v1753
        %1913 = vmatpush1.bf16.msra.mxu0 %v1752
        %1914 = vmatprep.subr.bf16.mxu0 %v1755
        %1915 = vmatpush1.bf16.msra.mxu0 %v1754
        %1916 = vmatprep.subr.bf16.mxu0 0
        %1917 = vmatpush1.bf16.msra.mxu0 0
        %1918 = vmatprep.subr.bf16.mxu0 0
        %1919 = vmatpush1.bf16.msra.mxu0 0
        %1920 = vmatprep.subr.bf16.mxu0 0
        %1921 = vmatpush1.bf16.msra.mxu0 0
        %1922 = vmatprep.subr.bf16.mxu0 0
        %1923 = vmatpush1.bf16.msra.mxu0 0
        %1924 = vmatprep.subr.bf16.mxu0 0
        %1925 = vmatpush1.bf16.msra.mxu0 0
        %1926 = vmatprep.subr.bf16.mxu0 0
        %1927 = vmatpush1.bf16.msra.mxu0 0
        %1928 = vmatprep.subr.bf16.mxu0 0
        %1929 = vmatpush1.bf16.msra.mxu0 0
        %1930 = vmatprep.subr.bf16.mxu0 0
        %1931 = vmatpush1.bf16.msra.mxu0 0
        %1932 = vmatprep.mubr.bf16.mxu0 0
        %1933 = vmatmul.mubr.bf16.gmra.mrb[0].mxu0 %v1884
        %v1934 = vpop.f32.mrb[0].mxu0
        %v1935 = vadd.f32 %v1775, %v1934
        %v1936 = vpop.f32.mrb[0].mxu0
        %v1937 = vadd.f32 %v1775, %v1936
        %v1938 = vpop.f32.mrb[0].mxu0
        %v1939 = vadd.f32 %v1780, %v1938
        %v1940 = vpop.f32.mrb[0].mxu0
        %v1941 = vadd.f32 %v1780, %v1940
        %1942 = vmatprep.mubr.bf16.mxu0 0
        %1943 = vmatmul.mubr.bf16.gmra.mrb[0].mxu0 %v1885
        %v1944 = vpop.f32.mrb[0].mxu0
        %v1945 = vadd.f32 %v1785, %v1944
        %v1946 = vpop.f32.mrb[0].mxu0
        %v1947 = vadd.f32 %v1785, %v1946
        %v1948 = vpop.f32.mrb[0].mxu0
        %v1949 = vadd.f32 %v1790, %v1948
        %v1950 = vpop.f32.mrb[0].mxu0
        %v1951 = vadd.f32 %v1790, %v1950
        %1952 = vmatprep.mubr.bf16.mxu0 0
        %1953 = vmatmul.mubr.bf16.gmra.mrb[0].mxu0 %v1886
        %v1954 = vpop.f32.mrb[0].mxu0
        %v1955 = vadd.f32 %v1795, %v1954
        %v1956 = vpop.f32.mrb[0].mxu0
        %v1957 = vadd.f32 %v1795, %v1956
        %v1958 = vpop.f32.mrb[0].mxu0
        %v1959 = vadd.f32 %v1800, %v1958
        %v1960 = vpop.f32.mrb[0].mxu0
        %v1961 = vadd.f32 %v1800, %v1960
        %1962 = vmatprep.mubr.bf16.mxu0 0
        %1963 = vmatmul.mubr.bf16.gmra.mrb[0].mxu0 %v1887
        %v1964 = vpop.f32.mrb[0].mxu0
        %v1965 = vadd.f32 %v1805, %v1964
        %v1966 = vpop.f32.mrb[0].mxu0
        %v1967 = vadd.f32 %v1805, %v1966
        %v1968 = vpop.f32.mrb[0].mxu0
        %v1969 = vadd.f32 %v1810, %v1968
        %v1970 = vpop.f32.mrb[0].mxu0
        %v1971 = vadd.f32 %v1810, %v1970
        %1972 = vmatprep.mubr.bf16.mxu0 0
        %1973 = vmatmul.mubr.bf16.gmra.mrb[0].mxu0 %v1888
        %v1974 = vpop.f32.mrb[0].mxu0
        %v1975 = vadd.f32 %v1815, %v1974
        %v1976 = vpop.f32.mrb[0].mxu0
        %v1977 = vadd.f32 %v1815, %v1976
        %v1978 = vpop.f32.mrb[0].mxu0
        %v1979 = vadd.f32 %v1820, %v1978
        %v1980 = vpop.f32.mrb[0].mxu0
        %v1981 = vadd.f32 %v1820, %v1980
        %1982 = vmatprep.mubr.bf16.mxu0 0
        %1983 = vmatmul.mubr.bf16.gmra.mrb[0].mxu0 %v1889
        %v1984 = vpop.f32.mrb[0].mxu0
        %v1985 = vadd.f32 %v1825, %v1984
        %v1986 = vpop.f32.mrb[0].mxu0
        %v1987 = vadd.f32 %v1825, %v1986
        %v1988 = vpop.f32.mrb[0].mxu0
        %v1989 = vadd.f32 %v1830, %v1988
        %v1990 = vpop.f32.mrb[0].mxu0
        %v1991 = vadd.f32 %v1830, %v1990
        %1992 = vmatprep.mubr.bf16.mxu0 0
        %1993 = vmatmul.mubr.bf16.gmra.mrb[0].mxu0 %v1890
        %v1994 = vpop.f32.mrb[0].mxu0
        %v1995 = vadd.f32 %v1835, %v1994
        %v1996 = vpop.f32.mrb[0].mxu0
        %v1997 = vadd.f32 %v1835, %v1996
        %v1998 = vpop.f32.mrb[0].mxu0
        %v1999 = vadd.f32 %v1840, %v1998
        %v2000 = vpop.f32.mrb[0].mxu0
        %v2001 = vadd.f32 %v1840, %v2000
        %2002 = vmatprep.mubr.bf16.mxu0 0
        %2003 = vmatmul.mubr.bf16.gmra.mrb[0].mxu0 %v1891
        %v2004 = vpop.f32.mrb[0].mxu0
        %v2005 = vadd.f32 %v1845, %v2004
        %v2006 = vpop.f32.mrb[0].mxu0
        %v2007 = vadd.f32 %v1845, %v2006
        %v2008 = vpop.f32.mrb[0].mxu0
        %v2009 = vadd.f32 %v1850, %v2008
        %v2010 = vpop.f32.mrb[0].mxu0
        %v2011 = vadd.f32 %v1850, %v2010
        %2012 = vdwg.mxu0
        %v2013 = vmax.f32 %v1935, 0.0
        %v2014 = vmax.f32 %v1937, 0.0
        %v2015 = vmax.f32 %v1939, 0.0
        %v2016 = vmax.f32 %v1941, 0.0
        %v2017 = vmax.f32 %v1945, 0.0
        %v2018 = vmax.f32 %v1947, 0.0
        %v2019 = vmax.f32 %v1949, 0.0
        %v2020 = vmax.f32 %v1951, 0.0
        %v2021 = vmax.f32 %v1955, 0.0
        %v2022 = vmax.f32 %v1957, 0.0
        %v2023 = vmax.f32 %v1959, 0.0
        %v2024 = vmax.f32 %v1961, 0.0
        %v2025 = vmax.f32 %v1965, 0.0
        %v2026 = vmax.f32 %v1967, 0.0
        %v2027 = vmax.f32 %v1969, 0.0
        %v2028 = vmax.f32 %v1971, 0.0
        %v2029 = vmax.f32 %v1975, 0.0
        %v2030 = vmax.f32 %v1977, 0.0
        %v2031 = vmax.f32 %v1979, 0.0
        %v2032 = vmax.f32 %v1981, 0.0
        %v2033 = vmax.f32 %v1985, 0.0
        %v2034 = vmax.f32 %v1987, 0.0
        %v2035 = vmax.f32 %v1989, 0.0
        %v2036 = vmax.f32 %v1991, 0.0
        %v2037 = vmax.f32 %v1995, 0.0
        %v2038 = vmax.f32 %v1997, 0.0
        %v2039 = vmax.f32 %v1999, 0.0
        %v2040 = vmax.f32 %v2001, 0.0
        %v2041 = vmax.f32 %v2005, 0.0
        %v2042 = vmax.f32 %v2007, 0.0
        %v2043 = vmax.f32 %v2009, 0.0
        %v2044 = vmax.f32 %v2011, 0.0
        %v2045 = vld [vmem:[%s5] sm:$0x3]
        %v2046 = vpack.c.bf16 %v2015, %v2013
        %v2047 = vpack.c.bf16 %v2016, %v2014
        %v2048 = vpack.c.bf16 %v2019, %v2017
        %v2049 = vpack.c.bf16 %v2020, %v2018
        %v2050 = vpack.c.bf16 %v2023, %v2021
        %v2051 = vpack.c.bf16 %v2024, %v2022
        %v2052 = vpack.c.bf16 %v2027, %v2025
        %v2053 = vpack.c.bf16 %v2028, %v2026
        %v2054 = vpack.c.bf16 %v2031, %v2029
        %v2055 = vpack.c.bf16 %v2032, %v2030
        %v2056 = vpack.c.bf16 %v2035, %v2033
        %v2057 = vpack.c.bf16 %v2036, %v2034
        %v2058 = vpack.c.bf16 %v2039, %v2037
        %v2059 = vpack.c.bf16 %v2040, %v2038
        %v2060 = vpack.c.bf16 %v2043, %v2041
        %v2061 = vpack.c.bf16 %v2044, %v2042
        %v2062 = vld [vmem:[%s6] sm:$0x7]
        %2064 = vset.pattern.permute.xlu0 0
        %2065 = vperm.xlu0 %2064, %v2062
        %v2066 = vpop.permute.xlu0 %2065
        %2068 = vmatprep.subr.bf16.mxu0 %v2047
        %2069 = vmatpush1.bf16.msra.mxu0 %v2046
        %2070 = vmatprep.subr.bf16.mxu0 %v2049
        %2071 = vmatpush1.bf16.msra.mxu0 %v2048
        %2072 = vmatprep.subr.bf16.mxu0 %v2051
        %2073 = vmatpush1.bf16.msra.mxu0 %v2050
        %2074 = vmatprep.subr.bf16.mxu0 %v2053
        %2075 = vmatpush1.bf16.msra.mxu0 %v2052
        %2076 = vmatprep.subr.bf16.mxu0 %v2055
        %2077 = vmatpush1.bf16.msra.mxu0 %v2054
        %2078 = vmatprep.subr.bf16.mxu0 %v2057
        %2079 = vmatpush1.bf16.msra.mxu0 %v2056
        %2080 = vmatprep.subr.bf16.mxu0 %v2059
        %2081 = vmatpush1.bf16.msra.mxu0 %v2058
        %2082 = vmatprep.subr.bf16.mxu0 %v2061
        %2083 = vmatpush1.bf16.msra.mxu0 %v2060
        %2084 = vmatprep.subr.bf16.mxu0 0
        %2085 = vmatpush1.bf16.msra.mxu0 0
        %2086 = vmatprep.subr.bf16.mxu0 0
        %2087 = vmatpush1.bf16.msra.mxu0 0
        %2088 = vmatprep.subr.bf16.mxu0 0
        %2089 = vmatpush1.bf16.msra.mxu0 0
        %2090 = vmatprep.subr.bf16.mxu0 0
        %2091 = vmatpush1.bf16.msra.mxu0 0
        %2092 = vmatprep.subr.bf16.mxu0 0
        %2093 = vmatpush1.bf16.msra.mxu0 0
        %2094 = vmatprep.subr.bf16.mxu0 0
        %2095 = vmatpush1.bf16.msra.mxu0 0
        %2096 = vmatprep.subr.bf16.mxu0 0
        %2097 = vmatpush1.bf16.msra.mxu0 0
        %2098 = vmatprep.subr.bf16.mxu0 0
        %2099 = vmatpush1.bf16.msra.mxu0 0
        %2100 = vmatprep.mubr.bf16.mxu0 0
        %2101 = vmatmul.mubr.bf16.gmra.mrb[0].mxu0 %v2045
        %v2102 = vpop.f32.mrb[0].mxu0
        %v2103 = vadd.f32 %v2066, %v2102
        %v2104 = vpop.f32.mrb[0].mxu0
        %v2105 = vadd.f32 %v2066, %v2104
        %v2106 = vpop.f32.mrb[0].mxu0
        %v2107 = vpop.f32.mrb[0].mxu0
        %2108 = vdwg.mxu0
        %v2109 = vsub.f32 0.0, %v2103
        %v2110 = vsub.f32 0.0, %v2105
        %v2111 = vmul.f32 %v2109, 1.442695
        %v2112 = vpow.pop %v2111
        %v2113 = vmul.f32 %v2110, 1.442695
        %v2114 = vpow.pop %v2113
        %v2115 = vadd.f32 %v2112, 1.0
        %v2116 = vadd.f32 %v2114, 1.0
        %v2117 = vrcp.pop %v2115
        %v2118 = vmul.f32 1.0, %v2117
        %v2119 = vrcp.pop %v2116
        %v2120 = vmul.f32 1.0, %v2119
        %v2123 = vcombine.low %v2118, %v2120
        %2125 = vst [vmem:[%s314] sm:$0x77] %v2123
        %s2126 = sand.u32 %s181, 1
        %s2127 = scalar_lea.sflag [#allocation4], %s2126
        %s2128 = sand.u32 %s181, 1
        %s2129 = smul.addr %s2128, 8
        %s2130 = scalar_lea.vmem [#allocation3], %s2129
        // Predicated region
        $region72: #{mlp_render_feature_forward.1} parent=66 // pred_check
          %p2131 = pneg %p191
        $region73: #{mlp_render_feature_forward.1} parent=66 // pred_check_branch
          %2133 = sbr.rel (%p2131) target = $region75
        $region74: #{mlp_render_feature_forward.1} parent=66 // pred_region
          %s2134 = smul.u32 2, %s21
          %s2136 = ssub.s32 128, 128
          %2137 = vsyncadd %s2127, %s2136
          %s2138 = smul.addr %s2134, 64
          %s2139 = scalar_lea.hbm %s7, %s2138
          %s2141 = sshll.u32 %s2130, 4
          %s2142 = int_to_ptr.vmem [resolvable:$true] %s2141
          %2144 = dma.vmem_to_hbm [thread:$0]  %s2142, 128, %s2139, %s2127
        $region75: #{mlp_render_feature_forward.1} parent=66 // pred_fallthru
          _
      $region67: #{mlp_render_feature_forward.1} parent=5 // pred_fallthru
        _
      %p2145 = scmp.le.s32.totalorder 2, %s16
      // Predicated region
      $region76: #{mlp_render_feature_forward.1} parent=5 // pred_check
        %p2146 = pneg %p2145
      $region77: #{mlp_render_feature_forward.1} parent=5 // pred_check_branch
        %2148 = sbr.rel (%p2146) target = $region79
      $region78: #{mlp_render_feature_forward.1} parent=5 // pred_region
        %s2149 = ssub.s32 %s16, 2
        // Predicated region
        $region80: #{mlp_render_feature_forward.1} parent=78 // pred_check
          %p2150 = pneg %p197
        $region81: #{mlp_render_feature_forward.1} parent=78 // pred_check_branch
          %2152 = sbr.rel (%p2150) target = $region83
        $region82: #{mlp_render_feature_forward.1} parent=78 // pred_region
          %s2153 = sand.u32 %s182, 1
          %s2154 = scalar_lea.sflag [#allocation4], %s2153
          %s2155 = sand.u32 %s182, 1
          %s2156 = smul.addr %s2155, 8
          %s2157 = scalar_lea.vmem [#allocation3], %s2156
          %2158 = dma.done %s2154, 128
        $region83: #{mlp_render_feature_forward.1} parent=78 // pred_fallthru
          _
      $region79: #{mlp_render_feature_forward.1} parent=5 // pred_fallthru
        _
    $region6: #{mlp_render_feature_forward.1} parent=1 // loop_footer
      %s20 = sadd.s32 1, %s16
    $region7: #{mlp_render_feature_forward.1} parent=1 // loop_footer_branch
      %15 = sbr.rel target = $region3
    $region8: #{mlp_render_feature_forward.1} parent=1 // loop_exit
      _
    %2159 = vsyncpa [#allocation4], 1
    %s2160 = scalar_lea.sflag [#allocation4], 1
    %2161 = vsyncpa %s2160, 1

</llo_original>
